<compile_context>
chip_gen: v7x
topology: tpu7x:2x2x1
jax: 0.10.0
libtpu: 0.0.40
codegen_flags: <defaults>
</compile_context>

<pallas_src>
import functools

import jax
import jax.numpy as jnp
from jax.experimental import pallas as pl
from jax.experimental.pallas import tpu as pltpu


# Aligned offsets of the image interior inside the halo scratch planes:
# sublane-aligned row offset, lane-aligned column offset -> the interior store
# is fully aligned and only the 3x3-shift reads are (cheap, static) unaligned.
_PADR = 8
_PADC = 128


def _fused_generator_kernel(x_ref, w1_ref, b1_ref, w2_ref, b2_ref, o_ref,
                            xpad_ref, h_ref, gpad_ref):
    """Fused conv3x3(1->C)+ReLU then conv3x3(C->2)+tanh for one batch element.

    x_ref  : (1, 1, H, W)   VMEM  input L plane (NCHW block, W on lanes)
    w1_ref : (9, C)         SMEM  conv1 taps, [t, c] with t = kh*3 + kw
    b1_ref : (1, C)         SMEM
    w2_ref : (9, 2*C)       SMEM  conv2 taps, [t, o*C + c]
    b2_ref : (1, 2)         SMEM
    o_ref  : (1, 2, H, W)   VMEM  output "ab" planes (NCHW block)
    xpad_ref, gpad_ref : zero-halo VMEM scratch planes
    h_ref  : (C, H, W)      VMEM  hidden activation (never leaves VMEM)
    """
    H = o_ref.shape[2]
    W = o_ref.shape[3]
    C = h_ref.shape[0]

    # ---- stage 0: place the input plane inside a zeroed halo buffer --------
    xpad_ref[...] = jnp.zeros_like(xpad_ref)
    xpad_ref[_PADR:_PADR + H, _PADC:_PADC + W] = x_ref[0, 0]

    # The 9 zero-filled shifted views of the input ('same' 3x3 halo).
    x_sh = []
    for kh in range(3):
        for kw in range(3):
            r0 = _PADR + kh - 1
            c0 = _PADC + kw - 1
            x_sh.append(xpad_ref[r0:r0 + H, c0:c0 + W])

    # ---- stage 1: conv1 (1 -> C) + ReLU as a VPU stencil --------------------
    @pl.loop(0, C)
    def _conv1(c):
        acc = jnp.full((H, W), b1_ref[0, c], dtype=jnp.float32)
        for t in range(9):
            acc = acc + w1_ref[t, c] * x_sh[t]
        h_ref[c] = jnp.maximum(acc, 0.0)

    # ---- stage 2: conv2 (C -> 2) + tanh, lane-dense NCHW output -------------
    gpad_ref[...] = jnp.zeros_like(gpad_ref)  # halo ring stays zero throughout
    for o in range(2):
        acc = jnp.full((H, W), b2_ref[0, o], dtype=jnp.float32)
        for t in range(9):
            kh, kw = t // 3, t % 3

            def _reduce(c, g, _t=t, _o=o):
                # aligned full-plane read of one hidden channel + scalar FMA
                return g + w2_ref[_t, _o * C + c] * h_ref[c]

            g = jax.lax.fori_loop(0, C, _reduce,
                                  jnp.zeros((H, W), dtype=jnp.float32))
            # shift the channel-reduced plane once per tap via the halo buffer
            gpad_ref[_PADR:_PADR + H, _PADC:_PADC + W] = g
            r0 = _PADR + kh - 1
            c0 = _PADC + kw - 1
            acc = acc + gpad_ref[r0:r0 + H, c0:c0 + W]
        o_ref[0, o] = jnp.tanh(acc).astype(o_ref.dtype)


def init_generator_params(hidden=32):
    """Deterministic stand-in generator parameters (1 -> hidden -> 2 channels)."""
    k1, k2, k3, k4 = jax.random.split(jax.random.PRNGKey(0), 4)
    w1 = 0.1 * jax.random.normal(k1, (3, 3, 1, hidden), dtype=jnp.float32)
    b1 = 0.05 * jax.random.normal(k2, (hidden,), dtype=jnp.float32)
    w2 = 0.1 * jax.random.normal(k3, (3, 3, hidden, 2), dtype=jnp.float32)
    b2 = 0.05 * jax.random.normal(k4, (2,), dtype=jnp.float32)
    return {"w1": w1, "b1": b1, "w2": w2, "b2": b2}


@jax.jit
def main_model_forward(L_nchw, params):
    """MainModel.forward(): fake_color = net_G(L).

    L_nchw  : (B, 1, H, W) float32  (PyTorch NCHW convention)
    returns : (B, 2, H, W) float32  fake_color ("ab" channels)
    """
    B, cin, H, W = L_nchw.shape
    assert cin == 1
    C = params["w1"].shape[-1]

    # Repack the tiny weights for SMEM scalar access inside the kernel.
    w1s = params["w1"].reshape(9, C)                                   # [t, c]
    b1s = params["b1"].reshape(1, C)
    w2s = jnp.transpose(params["w2"].reshape(9, C, 2), (0, 2, 1)).reshape(9, 2 * C)
    b2s = params["b2"].reshape(1, 2)

    pad_rows = H + 2 * _PADR
    pad_cols = W + 2 * _PADC
    smem = pltpu.MemorySpace.SMEM

    return pl.pallas_call(
        _fused_generator_kernel,
        out_shape=jax.ShapeDtypeStruct((B, 2, H, W), jnp.float32),
        grid_spec=pltpu.PrefetchScalarGridSpec(
            num_scalar_prefetch=0,
            grid=(B,),
            in_specs=[
                pl.BlockSpec((1, 1, H, W), lambda b: (b, 0, 0, 0)),
                pl.BlockSpec(memory_space=smem),   # w1s (9, C)
                pl.BlockSpec(memory_space=smem),   # b1s (1, C)
                pl.BlockSpec(memory_space=smem),   # w2s (9, 2C)
                pl.BlockSpec(memory_space=smem),   # b2s (1, 2)
            ],
            out_specs=pl.BlockSpec((1, 2, H, W), lambda b: (b, 0, 0, 0)),
            scratch_shapes=[
                pltpu.VMEM((pad_rows, pad_cols), jnp.float32),  # xpad halo plane
                pltpu.VMEM((C, H, W), jnp.float32),             # hidden activation
                pltpu.VMEM((pad_rows, pad_cols), jnp.float32),  # gpad halo plane
            ],
        ),
        compiler_params=pltpu.CompilerParams(
            dimension_semantics=("parallel",),
        ),
    )(L_nchw, w1s, b1s, w2s, b2s)


def generator_reference(L_nchw, params):
    """Pure-JAX reference of the stand-in generator (for correctness check)."""
    x = jnp.transpose(L_nchw, (0, 2, 3, 1))  # NHWC
    dn = ("NHWC", "HWIO", "NHWC")
    h = jax.lax.conv_general_dilated(
        x, params["w1"], (1, 1), "SAME", dimension_numbers=dn,
        precision=jax.lax.Precision.HIGHEST)
    h = jnp.maximum(h + params["b1"], 0.0)
    y = jax.lax.conv_general_dilated(
        h, params["w2"], (1, 1), "SAME", dimension_numbers=dn,
        precision=jax.lax.Precision.HIGHEST)
    y = jnp.tanh(y + params["b2"])
    return jnp.transpose(y, (0, 3, 1, 2))  # NCHW


if __name__ == "__main__":
    key = jax.random.PRNGKey(0)
    B, H, W = 2, 16, 16
    L = jax.random.normal(key, (B, 1, H, W), dtype=jnp.float32)  # L channel

    params = init_generator_params(hidden=32)

    fake_color = main_model_forward(L, params)
    fake_color = jax.block_until_ready(fake_color)

    assert fake_color.shape == (B, 2, H, W)
    assert fake_color.dtype == jnp.float32

    ref = jax.block_until_ready(generator_reference(L, params))
    max_err = float(jnp.max(jnp.abs(fake_color - ref)))
    assert max_err < 1e-3, f"mismatch vs pure-JAX reference: {max_err}"

    print("KERNEL_OK")
</pallas_src>

<mosaic_0001>
module attributes {stable_mosaic.version = 11 : i64} {
  func.func @_fused_generator_kernel(%arg0: i32, %arg1: memref<1x1x16x16xf32, #tpu.memory_space<vmem>>, %arg2: memref<9x32xf32, #tpu.memory_space<smem>>, %arg3: memref<1x32xf32, #tpu.memory_space<smem>>, %arg4: memref<9x64xf32, #tpu.memory_space<smem>>, %arg5: memref<1x2xf32, #tpu.memory_space<smem>>, %arg6: memref<1x2x16x16xf32, #tpu.memory_space<vmem>>, %arg7: memref<32x272xf32, #tpu.memory_space<vmem>>, %arg8: memref<32x16x16xf32, #tpu.memory_space<vmem>>, %arg9: memref<32x272xf32, #tpu.memory_space<vmem>>) attributes {dimension_semantics = [#tpu.dimension_semantics<parallel>], iteration_bounds = array<i64: 2>, scalar_prefetch = 0 : i64, scratch_operands = 3 : i64, tpu.core_type = #tpu.core_type<tc>, window_params = [{transform_indices = @transform_0, window_bounds = array<i64: 1, 1, 16, 16>}, {transform_indices = @transform_1, window_bounds = array<i64: 9, 32>}, {transform_indices = @transform_2, window_bounds = array<i64: 1, 32>}, {transform_indices = @transform_3, window_bounds = array<i64: 9, 64>}, {transform_indices = @transform_4, window_bounds = array<i64: 1, 2>}, {transform_indices = @transform_5, window_bounds = array<i64: 1, 2, 16, 16>}]} {
    %cst = arith.constant 0.000000e+00 : f32
    %0 = vector.broadcast %cst : f32 to vector<32x272xf32>
    %c0 = arith.constant 0 : index
    %c0_0 = arith.constant 0 : index
    %1 = vector.load %arg7[%c0, %c0_0] : memref<32x272xf32, #tpu.memory_space<vmem>>, vector<32x272xf32>
    tpu.vector_store %arg7[%c0, %c0_0], %0 {strides = array<i32>} : memref<32x272xf32, #tpu.memory_space<vmem>>, vector<32x272xf32>,
    %c0_1 = arith.constant 0 : index
    %c0_2 = arith.constant 0 : index
    %c0_3 = arith.constant 0 : index
    %c0_4 = arith.constant 0 : index
    %2 = vector.load %arg1[%c0_1, %c0_2, %c0_3, %c0_4] : memref<1x1x16x16xf32, #tpu.memory_space<vmem>>, vector<1x1x16x16xf32>
    %3 = vector.shape_cast %2 : vector<1x1x16x16xf32> to vector<16x16xf32>
    %c8 = arith.constant 8 : index
    %c128 = arith.constant 128 : index
    %4 = vector.load %arg7[%c8, %c128] : memref<32x272xf32, #tpu.memory_space<vmem>>, vector<16x16xf32>
    tpu.vector_store %arg7[%c8, %c128], %3 {strides = array<i32>} : memref<32x272xf32, #tpu.memory_space<vmem>>, vector<16x16xf32>,
    %c7 = arith.constant 7 : index
    %c127 = arith.constant 127 : index
    %5 = vector.load %arg7[%c7, %c127] : memref<32x272xf32, #tpu.memory_space<vmem>>, vector<16x16xf32>
    %c7_5 = arith.constant 7 : index
    %c128_6 = arith.constant 128 : index
    %6 = vector.load %arg7[%c7_5, %c128_6] : memref<32x272xf32, #tpu.memory_space<vmem>>, vector<16x16xf32>
    %c7_7 = arith.constant 7 : index
    %c129 = arith.constant 129 : index
    %7 = vector.load %arg7[%c7_7, %c129] : memref<32x272xf32, #tpu.memory_space<vmem>>, vector<16x16xf32>
    %c8_8 = arith.constant 8 : index
    %c127_9 = arith.constant 127 : index
    %8 = vector.load %arg7[%c8_8, %c127_9] : memref<32x272xf32, #tpu.memory_space<vmem>>, vector<16x16xf32>
    %c8_10 = arith.constant 8 : index
    %c128_11 = arith.constant 128 : index
    %9 = vector.load %arg7[%c8_10, %c128_11] : memref<32x272xf32, #tpu.memory_space<vmem>>, vector<16x16xf32>
    %c8_12 = arith.constant 8 : index
    %c129_13 = arith.constant 129 : index
    %10 = vector.load %arg7[%c8_12, %c129_13] : memref<32x272xf32, #tpu.memory_space<vmem>>, vector<16x16xf32>
    %c9 = arith.constant 9 : index
    %c127_14 = arith.constant 127 : index
    %11 = vector.load %arg7[%c9, %c127_14] : memref<32x272xf32, #tpu.memory_space<vmem>>, vector<16x16xf32>
    %c9_15 = arith.constant 9 : index
    %c128_16 = arith.constant 128 : index
    %12 = vector.load %arg7[%c9_15, %c128_16] : memref<32x272xf32, #tpu.memory_space<vmem>>, vector<16x16xf32>
    %c9_17 = arith.constant 9 : index
    %c129_18 = arith.constant 129 : index
    %13 = vector.load %arg7[%c9_17, %c129_18] : memref<32x272xf32, #tpu.memory_space<vmem>>, vector<16x16xf32>
    %c0_i32 = arith.constant 0 : i32
    %c32_i32 = arith.constant 32 : i32
    %14 = arith.addi %c0_i32, %c32_i32 : i32
    %c1_i32 = arith.constant 1 : i32
    scf.for %arg10 = %c0_i32 to %14 step %c1_i32  : i32 {
      %c1_i32_196 = arith.constant 1 : i32
      %137 = arith.muli %arg10, %c1_i32_196 : i32
      %c0_i32_197 = arith.constant 0 : i32
      %138 = arith.addi %c0_i32_197, %137 : i32
      %c0_198 = arith.constant 0 : index
      %139 = arith.index_cast %138 : i32 to index
      %140 = memref.load %arg3[%c0_198, %139] : memref<1x32xf32, #tpu.memory_space<smem>>
      %141 = vector.broadcast %140 : f32 to vector<16x16xf32>
      %c0_199 = arith.constant 0 : index
      %142 = arith.index_cast %138 : i32 to index
      %143 = memref.load %arg2[%c0_199, %142] : memref<9x32xf32, #tpu.memory_space<smem>>
      %144 = vector.broadcast %143 : f32 to vector<16x16xf32>
      %145 = arith.mulf %144, %5 : vector<16x16xf32>
      %146 = arith.addf %141, %145 : vector<16x16xf32>
      %c1_200 = arith.constant 1 : index
      %147 = arith.index_cast %138 : i32 to index
      %148 = memref.load %arg2[%c1_200, %147] : memref<9x32xf32, #tpu.memory_space<smem>>
      %149 = vector.broadcast %148 : f32 to vector<16x16xf32>
      %150 = arith.mulf %149, %6 : vector<16x16xf32>
      %151 = arith.addf %146, %150 : vector<16x16xf32>
      %c2 = arith.constant 2 : index
      %152 = arith.index_cast %138 : i32 to index
      %153 = memref.load %arg2[%c2, %152] : memref<9x32xf32, #tpu.memory_space<smem>>
      %154 = vector.broadcast %153 : f32 to vector<16x16xf32>
      %155 = arith.mulf %154, %7 : vector<16x16xf32>
      %156 = arith.addf %151, %155 : vector<16x16xf32>
      %c3 = arith.constant 3 : index
      %157 = arith.index_cast %138 : i32 to index
      %158 = memref.load %arg2[%c3, %157] : memref<9x32xf32, #tpu.memory_space<smem>>
      %159 = vector.broadcast %158 : f32 to vector<16x16xf32>
      %160 = arith.mulf %159, %8 : vector<16x16xf32>
      %161 = arith.addf %156, %160 : vector<16x16xf32>
      %c4 = arith.constant 4 : index
      %162 = arith.index_cast %138 : i32 to index
      %163 = memref.load %arg2[%c4, %162] : memref<9x32xf32, #tpu.memory_space<smem>>
      %164 = vector.broadcast %163 : f32 to vector<16x16xf32>
      %165 = arith.mulf %164, %9 : vector<16x16xf32>
      %166 = arith.addf %161, %165 : vector<16x16xf32>
      %c5 = arith.constant 5 : index
      %167 = arith.index_cast %138 : i32 to index
      %168 = memref.load %arg2[%c5, %167] : memref<9x32xf32, #tpu.memory_space<smem>>
      %169 = vector.broadcast %168 : f32 to vector<16x16xf32>
      %170 = arith.mulf %169, %10 : vector<16x16xf32>
      %171 = arith.addf %166, %170 : vector<16x16xf32>
      %c6 = arith.constant 6 : index
      %172 = arith.index_cast %138 : i32 to index
      %173 = memref.load %arg2[%c6, %172] : memref<9x32xf32, #tpu.memory_space<smem>>
      %174 = vector.broadcast %173 : f32 to vector<16x16xf32>
      %175 = arith.mulf %174, %11 : vector<16x16xf32>
      %176 = arith.addf %171, %175 : vector<16x16xf32>
      %c7_201 = arith.constant 7 : index
      %177 = arith.index_cast %138 : i32 to index
      %178 = memref.load %arg2[%c7_201, %177] : memref<9x32xf32, #tpu.memory_space<smem>>
      %179 = vector.broadcast %178 : f32 to vector<16x16xf32>
      %180 = arith.mulf %179, %12 : vector<16x16xf32>
      %181 = arith.addf %176, %180 : vector<16x16xf32>
      %c8_202 = arith.constant 8 : index
      %182 = arith.index_cast %138 : i32 to index
      %183 = memref.load %arg2[%c8_202, %182] : memref<9x32xf32, #tpu.memory_space<smem>>
      %184 = vector.broadcast %183 : f32 to vector<16x16xf32>
      %185 = arith.mulf %184, %13 : vector<16x16xf32>
      %186 = arith.addf %181, %185 : vector<16x16xf32>
      %cst_203 = arith.constant 0.000000e+00 : f32
      %187 = vector.broadcast %cst_203 : f32 to vector<16x16xf32>
      %188 = arith.maximumf %186, %187 : vector<16x16xf32>
      %189 = arith.index_cast %138 : i32 to index
      %c0_204 = arith.constant 0 : index
      %c0_205 = arith.constant 0 : index
      %190 = vector.load %arg8[%189, %c0_204, %c0_205] : memref<32x16x16xf32, #tpu.memory_space<vmem>>, vector<1x16x16xf32>
      %191 = vector.shape_cast %190 : vector<1x16x16xf32> to vector<16x16xf32>
      %192 = vector.shape_cast %188 : vector<16x16xf32> to vector<1x16x16xf32>
      tpu.vector_store %arg8[%189, %c0_204, %c0_205], %192 {strides = array<i32>} : memref<32x16x16xf32, #tpu.memory_space<vmem>>, vector<1x16x16xf32>,
    }
    %c32_i32_19 = arith.constant 32 : i32
    %cst_20 = arith.constant 0.000000e+00 : f32
    %15 = vector.broadcast %cst_20 : f32 to vector<32x272xf32>
    %c0_21 = arith.constant 0 : index
    %c0_22 = arith.constant 0 : index
    %16 = vector.load %arg9[%c0_21, %c0_22] : memref<32x272xf32, #tpu.memory_space<vmem>>, vector<32x272xf32>
    tpu.vector_store %arg9[%c0_21, %c0_22], %15 {strides = array<i32>} : memref<32x272xf32, #tpu.memory_space<vmem>>, vector<32x272xf32>,
    %c0_23 = arith.constant 0 : index
    %c0_24 = arith.constant 0 : index
    %17 = memref.load %arg5[%c0_23, %c0_24] : memref<1x2xf32, #tpu.memory_space<smem>>
    %18 = vector.broadcast %17 : f32 to vector<16x16xf32>
    %cst_25 = arith.constant 0.000000e+00 : f32
    %19 = vector.broadcast %cst_25 : f32 to vector<16x16xf32>
    %c0_i32_26 = arith.constant 0 : i32
    %c32_i32_27 = arith.constant 32 : i32
    %20 = arith.addi %c0_i32_26, %c32_i32_27 : i32
    %c1_i32_28 = arith.constant 1 : i32
    %21 = scf.for %arg10 = %c0_i32_26 to %20 step %c1_i32_28 iter_args(%arg11 = %19) -> (vector<16x16xf32>)  : i32 {
      %c0_i32_196 = arith.constant 0 : i32
      %137 = arith.addi %c0_i32_196, %arg10 : i32
      %c0_197 = arith.constant 0 : index
      %138 = arith.index_cast %137 : i32 to index
      %139 = memref.load %arg4[%c0_197, %138] : memref<9x64xf32, #tpu.memory_space<smem>>
      %140 = arith.index_cast %arg10 : i32 to index
      %c0_198 = arith.constant 0 : index
      %c0_199 = arith.constant 0 : index
      %141 = vector.load %arg8[%140, %c0_198, %c0_199] : memref<32x16x16xf32, #tpu.memory_space<vmem>>, vector<1x16x16xf32>
      %142 = vector.shape_cast %141 : vector<1x16x16xf32> to vector<16x16xf32>
      %143 = vector.broadcast %139 : f32 to vector<16x16xf32>
      %144 = arith.mulf %143, %142 : vector<16x16xf32>
      %145 = arith.addf %arg11, %144 : vector<16x16xf32>
      scf.yield %145 : vector<16x16xf32>
    }
    %c32_i32_29 = arith.constant 32 : i32
    %c8_30 = arith.constant 8 : index
    %c128_31 = arith.constant 128 : index
    %22 = vector.load %arg9[%c8_30, %c128_31] : memref<32x272xf32, #tpu.memory_space<vmem>>, vector<16x16xf32>
    tpu.vector_store %arg9[%c8_30, %c128_31], %21 {strides = array<i32>} : memref<32x272xf32, #tpu.memory_space<vmem>>, vector<16x16xf32>,
    %c7_32 = arith.constant 7 : index
    %c127_33 = arith.constant 127 : index
    %23 = vector.load %arg9[%c7_32, %c127_33] : memref<32x272xf32, #tpu.memory_space<vmem>>, vector<16x16xf32>
    %24 = arith.addf %18, %23 : vector<16x16xf32>
    %cst_34 = arith.constant 0.000000e+00 : f32
    %25 = vector.broadcast %cst_34 : f32 to vector<16x16xf32>
    %c0_i32_35 = arith.constant 0 : i32
    %c32_i32_36 = arith.constant 32 : i32
    %26 = arith.addi %c0_i32_35, %c32_i32_36 : i32
    %c1_i32_37 = arith.constant 1 : i32
    %27 = scf.for %arg10 = %c0_i32_35 to %26 step %c1_i32_37 iter_args(%arg11 = %25) -> (vector<16x16xf32>)  : i32 {
      %c0_i32_196 = arith.constant 0 : i32
      %137 = arith.addi %c0_i32_196, %arg10 : i32
      %c1_197 = arith.constant 1 : index
      %138 = arith.index_cast %137 : i32 to index
      %139 = memref.load %arg4[%c1_197, %138] : memref<9x64xf32, #tpu.memory_space<smem>>
      %140 = arith.index_cast %arg10 : i32 to index
      %c0_198 = arith.constant 0 : index
      %c0_199 = arith.constant 0 : index
      %141 = vector.load %arg8[%140, %c0_198, %c0_199] : memref<32x16x16xf32, #tpu.memory_space<vmem>>, vector<1x16x16xf32>
      %142 = vector.shape_cast %141 : vector<1x16x16xf32> to vector<16x16xf32>
      %143 = vector.broadcast %139 : f32 to vector<16x16xf32>
      %144 = arith.mulf %143, %142 : vector<16x16xf32>
      %145 = arith.addf %arg11, %144 : vector<16x16xf32>
      scf.yield %145 : vector<16x16xf32>
    }
    %c32_i32_38 = arith.constant 32 : i32
    %c8_39 = arith.constant 8 : index
    %c128_40 = arith.constant 128 : index
    %28 = vector.load %arg9[%c8_39, %c128_40] : memref<32x272xf32, #tpu.memory_space<vmem>>, vector<16x16xf32>
    tpu.vector_store %arg9[%c8_39, %c128_40], %27 {strides = array<i32>} : memref<32x272xf32, #tpu.memory_space<vmem>>, vector<16x16xf32>,
    %c7_41 = arith.constant 7 : index
    %c128_42 = arith.constant 128 : index
    %29 = vector.load %arg9[%c7_41, %c128_42] : memref<32x272xf32, #tpu.memory_space<vmem>>, vector<16x16xf32>
    %30 = arith.addf %24, %29 : vector<16x16xf32>
    %cst_43 = arith.constant 0.000000e+00 : f32
    %31 = vector.broadcast %cst_43 : f32 to vector<16x16xf32>
    %c0_i32_44 = arith.constant 0 : i32
    %c32_i32_45 = arith.constant 32 : i32
    %32 = arith.addi %c0_i32_44, %c32_i32_45 : i32
    %c1_i32_46 = arith.constant 1 : i32
    %33 = scf.for %arg10 = %c0_i32_44 to %32 step %c1_i32_46 iter_args(%arg11 = %31) -> (vector<16x16xf32>)  : i32 {
      %c0_i32_196 = arith.constant 0 : i32
      %137 = arith.addi %c0_i32_196, %arg10 : i32
      %c2 = arith.constant 2 : index
      %138 = arith.index_cast %137 : i32 to index
      %139 = memref.load %arg4[%c2, %138] : memref<9x64xf32, #tpu.memory_space<smem>>
      %140 = arith.index_cast %arg10 : i32 to index
      %c0_197 = arith.constant 0 : index
      %c0_198 = arith.constant 0 : index
      %141 = vector.load %arg8[%140, %c0_197, %c0_198] : memref<32x16x16xf32, #tpu.memory_space<vmem>>, vector<1x16x16xf32>
      %142 = vector.shape_cast %141 : vector<1x16x16xf32> to vector<16x16xf32>
      %143 = vector.broadcast %139 : f32 to vector<16x16xf32>
      %144 = arith.mulf %143, %142 : vector<16x16xf32>
      %145 = arith.addf %arg11, %144 : vector<16x16xf32>
      scf.yield %145 : vector<16x16xf32>
    }
    %c32_i32_47 = arith.constant 32 : i32
    %c8_48 = arith.constant 8 : index
    %c128_49 = arith.constant 128 : index
    %34 = vector.load %arg9[%c8_48, %c128_49] : memref<32x272xf32, #tpu.memory_space<vmem>>, vector<16x16xf32>
    tpu.vector_store %arg9[%c8_48, %c128_49], %33 {strides = array<i32>} : memref<32x272xf32, #tpu.memory_space<vmem>>, vector<16x16xf32>,
    %c7_50 = arith.constant 7 : index
    %c129_51 = arith.constant 129 : index
    %35 = vector.load %arg9[%c7_50, %c129_51] : memref<32x272xf32, #tpu.memory_space<vmem>>, vector<16x16xf32>
    %36 = arith.addf %30, %35 : vector<16x16xf32>
    %cst_52 = arith.constant 0.000000e+00 : f32
    %37 = vector.broadcast %cst_52 : f32 to vector<16x16xf32>
    %c0_i32_53 = arith.constant 0 : i32
    %c32_i32_54 = arith.constant 32 : i32
    %38 = arith.addi %c0_i32_53, %c32_i32_54 : i32
    %c1_i32_55 = arith.constant 1 : i32
    %39 = scf.for %arg10 = %c0_i32_53 to %38 step %c1_i32_55 iter_args(%arg11 = %37) -> (vector<16x16xf32>)  : i32 {
      %c0_i32_196 = arith.constant 0 : i32
      %137 = arith.addi %c0_i32_196, %arg10 : i32
      %c3 = arith.constant 3 : index
      %138 = arith.index_cast %137 : i32 to index
      %139 = memref.load %arg4[%c3, %138] : memref<9x64xf32, #tpu.memory_space<smem>>
      %140 = arith.index_cast %arg10 : i32 to index
      %c0_197 = arith.constant 0 : index
      %c0_198 = arith.constant 0 : index
      %141 = vector.load %arg8[%140, %c0_197, %c0_198] : memref<32x16x16xf32, #tpu.memory_space<vmem>>, vector<1x16x16xf32>
      %142 = vector.shape_cast %141 : vector<1x16x16xf32> to vector<16x16xf32>
      %143 = vector.broadcast %139 : f32 to vector<16x16xf32>
      %144 = arith.mulf %143, %142 : vector<16x16xf32>
      %145 = arith.addf %arg11, %144 : vector<16x16xf32>
      scf.yield %145 : vector<16x16xf32>
    }
    %c32_i32_56 = arith.constant 32 : i32
    %c8_57 = arith.constant 8 : index
    %c128_58 = arith.constant 128 : index
    %40 = vector.load %arg9[%c8_57, %c128_58] : memref<32x272xf32, #tpu.memory_space<vmem>>, vector<16x16xf32>
    tpu.vector_store %arg9[%c8_57, %c128_58], %39 {strides = array<i32>} : memref<32x272xf32, #tpu.memory_space<vmem>>, vector<16x16xf32>,
    %c8_59 = arith.constant 8 : index
    %c127_60 = arith.constant 127 : index
    %41 = vector.load %arg9[%c8_59, %c127_60] : memref<32x272xf32, #tpu.memory_space<vmem>>, vector<16x16xf32>
    %42 = arith.addf %36, %41 : vector<16x16xf32>
    %cst_61 = arith.constant 0.000000e+00 : f32
    %43 = vector.broadcast %cst_61 : f32 to vector<16x16xf32>
    %c0_i32_62 = arith.constant 0 : i32
    %c32_i32_63 = arith.constant 32 : i32
    %44 = arith.addi %c0_i32_62, %c32_i32_63 : i32
    %c1_i32_64 = arith.constant 1 : i32
    %45 = scf.for %arg10 = %c0_i32_62 to %44 step %c1_i32_64 iter_args(%arg11 = %43) -> (vector<16x16xf32>)  : i32 {
      %c0_i32_196 = arith.constant 0 : i32
      %137 = arith.addi %c0_i32_196, %arg10 : i32
      %c4 = arith.constant 4 : index
      %138 = arith.index_cast %137 : i32 to index
      %139 = memref.load %arg4[%c4, %138] : memref<9x64xf32, #tpu.memory_space<smem>>
      %140 = arith.index_cast %arg10 : i32 to index
      %c0_197 = arith.constant 0 : index
      %c0_198 = arith.constant 0 : index
      %141 = vector.load %arg8[%140, %c0_197, %c0_198] : memref<32x16x16xf32, #tpu.memory_space<vmem>>, vector<1x16x16xf32>
      %142 = vector.shape_cast %141 : vector<1x16x16xf32> to vector<16x16xf32>
      %143 = vector.broadcast %139 : f32 to vector<16x16xf32>
      %144 = arith.mulf %143, %142 : vector<16x16xf32>
      %145 = arith.addf %arg11, %144 : vector<16x16xf32>
      scf.yield %145 : vector<16x16xf32>
    }
    %c32_i32_65 = arith.constant 32 : i32
    %c8_66 = arith.constant 8 : index
    %c128_67 = arith.constant 128 : index
    %46 = vector.load %arg9[%c8_66, %c128_67] : memref<32x272xf32, #tpu.memory_space<vmem>>, vector<16x16xf32>
    tpu.vector_store %arg9[%c8_66, %c128_67], %45 {strides = array<i32>} : memref<32x272xf32, #tpu.memory_space<vmem>>, vector<16x16xf32>,
    %c8_68 = arith.constant 8 : index
    %c128_69 = arith.constant 128 : index
    %47 = vector.load %arg9[%c8_68, %c128_69] : memref<32x272xf32, #tpu.memory_space<vmem>>, vector<16x16xf32>
    %48 = arith.addf %42, %47 : vector<16x16xf32>
    %cst_70 = arith.constant 0.000000e+00 : f32
    %49 = vector.broadcast %cst_70 : f32 to vector<16x16xf32>
    %c0_i32_71 = arith.constant 0 : i32
    %c32_i32_72 = arith.constant 32 : i32
    %50 = arith.addi %c0_i32_71, %c32_i32_72 : i32
    %c1_i32_73 = arith.constant 1 : i32
    %51 = scf.for %arg10 = %c0_i32_71 to %50 step %c1_i32_73 iter_args(%arg11 = %49) -> (vector<16x16xf32>)  : i32 {
      %c0_i32_196 = arith.constant 0 : i32
      %137 = arith.addi %c0_i32_196, %arg10 : i32
      %c5 = arith.constant 5 : index
      %138 = arith.index_cast %137 : i32 to index
      %139 = memref.load %arg4[%c5, %138] : memref<9x64xf32, #tpu.memory_space<smem>>
      %140 = arith.index_cast %arg10 : i32 to index
      %c0_197 = arith.constant 0 : index
      %c0_198 = arith.constant 0 : index
      %141 = vector.load %arg8[%140, %c0_197, %c0_198] : memref<32x16x16xf32, #tpu.memory_space<vmem>>, vector<1x16x16xf32>
      %142 = vector.shape_cast %141 : vector<1x16x16xf32> to vector<16x16xf32>
      %143 = vector.broadcast %139 : f32 to vector<16x16xf32>
      %144 = arith.mulf %143, %142 : vector<16x16xf32>
      %145 = arith.addf %arg11, %144 : vector<16x16xf32>
      scf.yield %145 : vector<16x16xf32>
    }
    %c32_i32_74 = arith.constant 32 : i32
    %c8_75 = arith.constant 8 : index
    %c128_76 = arith.constant 128 : index
    %52 = vector.load %arg9[%c8_75, %c128_76] : memref<32x272xf32, #tpu.memory_space<vmem>>, vector<16x16xf32>
    tpu.vector_store %arg9[%c8_75, %c128_76], %51 {strides = array<i32>} : memref<32x272xf32, #tpu.memory_space<vmem>>, vector<16x16xf32>,
    %c8_77 = arith.constant 8 : index
    %c129_78 = arith.constant 129 : index
    %53 = vector.load %arg9[%c8_77, %c129_78] : memref<32x272xf32, #tpu.memory_space<vmem>>, vector<16x16xf32>
    %54 = arith.addf %48, %53 : vector<16x16xf32>
    %cst_79 = arith.constant 0.000000e+00 : f32
    %55 = vector.broadcast %cst_79 : f32 to vector<16x16xf32>
    %c0_i32_80 = arith.constant 0 : i32
    %c32_i32_81 = arith.constant 32 : i32
    %56 = arith.addi %c0_i32_80, %c32_i32_81 : i32
    %c1_i32_82 = arith.constant 1 : i32
    %57 = scf.for %arg10 = %c0_i32_80 to %56 step %c1_i32_82 iter_args(%arg11 = %55) -> (vector<16x16xf32>)  : i32 {
      %c0_i32_196 = arith.constant 0 : i32
      %137 = arith.addi %c0_i32_196, %arg10 : i32
      %c6 = arith.constant 6 : index
      %138 = arith.index_cast %137 : i32 to index
      %139 = memref.load %arg4[%c6, %138] : memref<9x64xf32, #tpu.memory_space<smem>>
      %140 = arith.index_cast %arg10 : i32 to index
      %c0_197 = arith.constant 0 : index
      %c0_198 = arith.constant 0 : index
      %141 = vector.load %arg8[%140, %c0_197, %c0_198] : memref<32x16x16xf32, #tpu.memory_space<vmem>>, vector<1x16x16xf32>
      %142 = vector.shape_cast %141 : vector<1x16x16xf32> to vector<16x16xf32>
      %143 = vector.broadcast %139 : f32 to vector<16x16xf32>
      %144 = arith.mulf %143, %142 : vector<16x16xf32>
      %145 = arith.addf %arg11, %144 : vector<16x16xf32>
      scf.yield %145 : vector<16x16xf32>
    }
    %c32_i32_83 = arith.constant 32 : i32
    %c8_84 = arith.constant 8 : index
    %c128_85 = arith.constant 128 : index
    %58 = vector.load %arg9[%c8_84, %c128_85] : memref<32x272xf32, #tpu.memory_space<vmem>>, vector<16x16xf32>
    tpu.vector_store %arg9[%c8_84, %c128_85], %57 {strides = array<i32>} : memref<32x272xf32, #tpu.memory_space<vmem>>, vector<16x16xf32>,
    %c9_86 = arith.constant 9 : index
    %c127_87 = arith.constant 127 : index
    %59 = vector.load %arg9[%c9_86, %c127_87] : memref<32x272xf32, #tpu.memory_space<vmem>>, vector<16x16xf32>
    %60 = arith.addf %54, %59 : vector<16x16xf32>
    %cst_88 = arith.constant 0.000000e+00 : f32
    %61 = vector.broadcast %cst_88 : f32 to vector<16x16xf32>
    %c0_i32_89 = arith.constant 0 : i32
    %c32_i32_90 = arith.constant 32 : i32
    %62 = arith.addi %c0_i32_89, %c32_i32_90 : i32
    %c1_i32_91 = arith.constant 1 : i32
    %63 = scf.for %arg10 = %c0_i32_89 to %62 step %c1_i32_91 iter_args(%arg11 = %61) -> (vector<16x16xf32>)  : i32 {
      %c0_i32_196 = arith.constant 0 : i32
      %137 = arith.addi %c0_i32_196, %arg10 : i32
      %c7_197 = arith.constant 7 : index
      %138 = arith.index_cast %137 : i32 to index
      %139 = memref.load %arg4[%c7_197, %138] : memref<9x64xf32, #tpu.memory_space<smem>>
      %140 = arith.index_cast %arg10 : i32 to index
      %c0_198 = arith.constant 0 : index
      %c0_199 = arith.constant 0 : index
      %141 = vector.load %arg8[%140, %c0_198, %c0_199] : memref<32x16x16xf32, #tpu.memory_space<vmem>>, vector<1x16x16xf32>
      %142 = vector.shape_cast %141 : vector<1x16x16xf32> to vector<16x16xf32>
      %143 = vector.broadcast %139 : f32 to vector<16x16xf32>
      %144 = arith.mulf %143, %142 : vector<16x16xf32>
      %145 = arith.addf %arg11, %144 : vector<16x16xf32>
      scf.yield %145 : vector<16x16xf32>
    }
    %c32_i32_92 = arith.constant 32 : i32
    %c8_93 = arith.constant 8 : index
    %c128_94 = arith.constant 128 : index
    %64 = vector.load %arg9[%c8_93, %c128_94] : memref<32x272xf32, #tpu.memory_space<vmem>>, vector<16x16xf32>
    tpu.vector_store %arg9[%c8_93, %c128_94], %63 {strides = array<i32>} : memref<32x272xf32, #tpu.memory_space<vmem>>, vector<16x16xf32>,
    %c9_95 = arith.constant 9 : index
    %c128_96 = arith.constant 128 : index
    %65 = vector.load %arg9[%c9_95, %c128_96] : memref<32x272xf32, #tpu.memory_space<vmem>>, vector<16x16xf32>
    %66 = arith.addf %60, %65 : vector<16x16xf32>
    %cst_97 = arith.constant 0.000000e+00 : f32
    %67 = vector.broadcast %cst_97 : f32 to vector<16x16xf32>
    %c0_i32_98 = arith.constant 0 : i32
    %c32_i32_99 = arith.constant 32 : i32
    %68 = arith.addi %c0_i32_98, %c32_i32_99 : i32
    %c1_i32_100 = arith.constant 1 : i32
    %69 = scf.for %arg10 = %c0_i32_98 to %68 step %c1_i32_100 iter_args(%arg11 = %67) -> (vector<16x16xf32>)  : i32 {
      %c0_i32_196 = arith.constant 0 : i32
      %137 = arith.addi %c0_i32_196, %arg10 : i32
      %c8_197 = arith.constant 8 : index
      %138 = arith.index_cast %137 : i32 to index
      %139 = memref.load %arg4[%c8_197, %138] : memref<9x64xf32, #tpu.memory_space<smem>>
      %140 = arith.index_cast %arg10 : i32 to index
      %c0_198 = arith.constant 0 : index
      %c0_199 = arith.constant 0 : index
      %141 = vector.load %arg8[%140, %c0_198, %c0_199] : memref<32x16x16xf32, #tpu.memory_space<vmem>>, vector<1x16x16xf32>
      %142 = vector.shape_cast %141 : vector<1x16x16xf32> to vector<16x16xf32>
      %143 = vector.broadcast %139 : f32 to vector<16x16xf32>
      %144 = arith.mulf %143, %142 : vector<16x16xf32>
      %145 = arith.addf %arg11, %144 : vector<16x16xf32>
      scf.yield %145 : vector<16x16xf32>
    }
    %c32_i32_101 = arith.constant 32 : i32
    %c8_102 = arith.constant 8 : index
    %c128_103 = arith.constant 128 : index
    %70 = vector.load %arg9[%c8_102, %c128_103] : memref<32x272xf32, #tpu.memory_space<vmem>>, vector<16x16xf32>
    tpu.vector_store %arg9[%c8_102, %c128_103], %69 {strides = array<i32>} : memref<32x272xf32, #tpu.memory_space<vmem>>, vector<16x16xf32>,
    %c9_104 = arith.constant 9 : index
    %c129_105 = arith.constant 129 : index
    %71 = vector.load %arg9[%c9_104, %c129_105] : memref<32x272xf32, #tpu.memory_space<vmem>>, vector<16x16xf32>
    %72 = arith.addf %66, %71 : vector<16x16xf32>
    %73 = math.tanh %72 : vector<16x16xf32>
    %c0_106 = arith.constant 0 : index
    %c0_107 = arith.constant 0 : index
    %c0_108 = arith.constant 0 : index
    %c0_109 = arith.constant 0 : index
    %74 = vector.load %arg6[%c0_106, %c0_107, %c0_108, %c0_109] : memref<1x2x16x16xf32, #tpu.memory_space<vmem>>, vector<1x1x16x16xf32>
    %75 = vector.shape_cast %74 : vector<1x1x16x16xf32> to vector<16x16xf32>
    %76 = vector.shape_cast %73 : vector<16x16xf32> to vector<1x1x16x16xf32>
    tpu.vector_store %arg6[%c0_106, %c0_107, %c0_108, %c0_109], %76 {strides = array<i32>} : memref<1x2x16x16xf32, #tpu.memory_space<vmem>>, vector<1x1x16x16xf32>,
    %c0_110 = arith.constant 0 : index
    %c1 = arith.constant 1 : index
    %77 = memref.load %arg5[%c0_110, %c1] : memref<1x2xf32, #tpu.memory_space<smem>>
    %78 = vector.broadcast %77 : f32 to vector<16x16xf32>
    %cst_111 = arith.constant 0.000000e+00 : f32
    %79 = vector.broadcast %cst_111 : f32 to vector<16x16xf32>
    %c0_i32_112 = arith.constant 0 : i32
    %c32_i32_113 = arith.constant 32 : i32
    %80 = arith.addi %c0_i32_112, %c32_i32_113 : i32
    %c1_i32_114 = arith.constant 1 : i32
    %81 = scf.for %arg10 = %c0_i32_112 to %80 step %c1_i32_114 iter_args(%arg11 = %79) -> (vector<16x16xf32>)  : i32 {
      %c32_i32_196 = arith.constant 32 : i32
      %137 = arith.addi %c32_i32_196, %arg10 : i32
      %c0_197 = arith.constant 0 : index
      %138 = arith.index_cast %137 : i32 to index
      %139 = memref.load %arg4[%c0_197, %138] : memref<9x64xf32, #tpu.memory_space<smem>>
      %140 = arith.index_cast %arg10 : i32 to index
      %c0_198 = arith.constant 0 : index
      %c0_199 = arith.constant 0 : index
      %141 = vector.load %arg8[%140, %c0_198, %c0_199] : memref<32x16x16xf32, #tpu.memory_space<vmem>>, vector<1x16x16xf32>
      %142 = vector.shape_cast %141 : vector<1x16x16xf32> to vector<16x16xf32>
      %143 = vector.broadcast %139 : f32 to vector<16x16xf32>
      %144 = arith.mulf %143, %142 : vector<16x16xf32>
      %145 = arith.addf %arg11, %144 : vector<16x16xf32>
      scf.yield %145 : vector<16x16xf32>
    }
    %c32_i32_115 = arith.constant 32 : i32
    %c8_116 = arith.constant 8 : index
    %c128_117 = arith.constant 128 : index
    %82 = vector.load %arg9[%c8_116, %c128_117] : memref<32x272xf32, #tpu.memory_space<vmem>>, vector<16x16xf32>
    tpu.vector_store %arg9[%c8_116, %c128_117], %81 {strides = array<i32>} : memref<32x272xf32, #tpu.memory_space<vmem>>, vector<16x16xf32>,
    %c7_118 = arith.constant 7 : index
    %c127_119 = arith.constant 127 : index
    %83 = vector.load %arg9[%c7_118, %c127_119] : memref<32x272xf32, #tpu.memory_space<vmem>>, vector<16x16xf32>
    %84 = arith.addf %78, %83 : vector<16x16xf32>
    %cst_120 = arith.constant 0.000000e+00 : f32
    %85 = vector.broadcast %cst_120 : f32 to vector<16x16xf32>
    %c0_i32_121 = arith.constant 0 : i32
    %c32_i32_122 = arith.constant 32 : i32
    %86 = arith.addi %c0_i32_121, %c32_i32_122 : i32
    %c1_i32_123 = arith.constant 1 : i32
    %87 = scf.for %arg10 = %c0_i32_121 to %86 step %c1_i32_123 iter_args(%arg11 = %85) -> (vector<16x16xf32>)  : i32 {
      %c32_i32_196 = arith.constant 32 : i32
      %137 = arith.addi %c32_i32_196, %arg10 : i32
      %c1_197 = arith.constant 1 : index
      %138 = arith.index_cast %137 : i32 to index
      %139 = memref.load %arg4[%c1_197, %138] : memref<9x64xf32, #tpu.memory_space<smem>>
      %140 = arith.index_cast %arg10 : i32 to index
      %c0_198 = arith.constant 0 : index
      %c0_199 = arith.constant 0 : index
      %141 = vector.load %arg8[%140, %c0_198, %c0_199] : memref<32x16x16xf32, #tpu.memory_space<vmem>>, vector<1x16x16xf32>
      %142 = vector.shape_cast %141 : vector<1x16x16xf32> to vector<16x16xf32>
      %143 = vector.broadcast %139 : f32 to vector<16x16xf32>
      %144 = arith.mulf %143, %142 : vector<16x16xf32>
      %145 = arith.addf %arg11, %144 : vector<16x16xf32>
      scf.yield %145 : vector<16x16xf32>
    }
    %c32_i32_124 = arith.constant 32 : i32
    %c8_125 = arith.constant 8 : index
    %c128_126 = arith.constant 128 : index
    %88 = vector.load %arg9[%c8_125, %c128_126] : memref<32x272xf32, #tpu.memory_space<vmem>>, vector<16x16xf32>
    tpu.vector_store %arg9[%c8_125, %c128_126], %87 {strides = array<i32>} : memref<32x272xf32, #tpu.memory_space<vmem>>, vector<16x16xf32>,
    %c7_127 = arith.constant 7 : index
    %c128_128 = arith.constant 128 : index
    %89 = vector.load %arg9[%c7_127, %c128_128] : memref<32x272xf32, #tpu.memory_space<vmem>>, vector<16x16xf32>
    %90 = arith.addf %84, %89 : vector<16x16xf32>
    %cst_129 = arith.constant 0.000000e+00 : f32
    %91 = vector.broadcast %cst_129 : f32 to vector<16x16xf32>
    %c0_i32_130 = arith.constant 0 : i32
    %c32_i32_131 = arith.constant 32 : i32
    %92 = arith.addi %c0_i32_130, %c32_i32_131 : i32
    %c1_i32_132 = arith.constant 1 : i32
    %93 = scf.for %arg10 = %c0_i32_130 to %92 step %c1_i32_132 iter_args(%arg11 = %91) -> (vector<16x16xf32>)  : i32 {
      %c32_i32_196 = arith.constant 32 : i32
      %137 = arith.addi %c32_i32_196, %arg10 : i32
      %c2 = arith.constant 2 : index
      %138 = arith.index_cast %137 : i32 to index
      %139 = memref.load %arg4[%c2, %138] : memref<9x64xf32, #tpu.memory_space<smem>>
      %140 = arith.index_cast %arg10 : i32 to index
      %c0_197 = arith.constant 0 : index
      %c0_198 = arith.constant 0 : index
      %141 = vector.load %arg8[%140, %c0_197, %c0_198] : memref<32x16x16xf32, #tpu.memory_space<vmem>>, vector<1x16x16xf32>
      %142 = vector.shape_cast %141 : vector<1x16x16xf32> to vector<16x16xf32>
      %143 = vector.broadcast %139 : f32 to vector<16x16xf32>
      %144 = arith.mulf %143, %142 : vector<16x16xf32>
      %145 = arith.addf %arg11, %144 : vector<16x16xf32>
      scf.yield %145 : vector<16x16xf32>
    }
    %c32_i32_133 = arith.constant 32 : i32
    %c8_134 = arith.constant 8 : index
    %c128_135 = arith.constant 128 : index
    %94 = vector.load %arg9[%c8_134, %c128_135] : memref<32x272xf32, #tpu.memory_space<vmem>>, vector<16x16xf32>
    tpu.vector_store %arg9[%c8_134, %c128_135], %93 {strides = array<i32>} : memref<32x272xf32, #tpu.memory_space<vmem>>, vector<16x16xf32>,
    %c7_136 = arith.constant 7 : index
    %c129_137 = arith.constant 129 : index
    %95 = vector.load %arg9[%c7_136, %c129_137] : memref<32x272xf32, #tpu.memory_space<vmem>>, vector<16x16xf32>
    %96 = arith.addf %90, %95 : vector<16x16xf32>
    %cst_138 = arith.constant 0.000000e+00 : f32
    %97 = vector.broadcast %cst_138 : f32 to vector<16x16xf32>
    %c0_i32_139 = arith.constant 0 : i32
    %c32_i32_140 = arith.constant 32 : i32
    %98 = arith.addi %c0_i32_139, %c32_i32_140 : i32
    %c1_i32_141 = arith.constant 1 : i32
    %99 = scf.for %arg10 = %c0_i32_139 to %98 step %c1_i32_141 iter_args(%arg11 = %97) -> (vector<16x16xf32>)  : i32 {
      %c32_i32_196 = arith.constant 32 : i32
      %137 = arith.addi %c32_i32_196, %arg10 : i32
      %c3 = arith.constant 3 : index
      %138 = arith.index_cast %137 : i32 to index
      %139 = memref.load %arg4[%c3, %138] : memref<9x64xf32, #tpu.memory_space<smem>>
      %140 = arith.index_cast %arg10 : i32 to index
      %c0_197 = arith.constant 0 : index
      %c0_198 = arith.constant 0 : index
      %141 = vector.load %arg8[%140, %c0_197, %c0_198] : memref<32x16x16xf32, #tpu.memory_space<vmem>>, vector<1x16x16xf32>
      %142 = vector.shape_cast %141 : vector<1x16x16xf32> to vector<16x16xf32>
      %143 = vector.broadcast %139 : f32 to vector<16x16xf32>
      %144 = arith.mulf %143, %142 : vector<16x16xf32>
      %145 = arith.addf %arg11, %144 : vector<16x16xf32>
      scf.yield %145 : vector<16x16xf32>
    }
    %c32_i32_142 = arith.constant 32 : i32
    %c8_143 = arith.constant 8 : index
    %c128_144 = arith.constant 128 : index
    %100 = vector.load %arg9[%c8_143, %c128_144] : memref<32x272xf32, #tpu.memory_space<vmem>>, vector<16x16xf32>
    tpu.vector_store %arg9[%c8_143, %c128_144], %99 {strides = array<i32>} : memref<32x272xf32, #tpu.memory_space<vmem>>, vector<16x16xf32>,
    %c8_145 = arith.constant 8 : index
    %c127_146 = arith.constant 127 : index
    %101 = vector.load %arg9[%c8_145, %c127_146] : memref<32x272xf32, #tpu.memory_space<vmem>>, vector<16x16xf32>
    %102 = arith.addf %96, %101 : vector<16x16xf32>
    %cst_147 = arith.constant 0.000000e+00 : f32
    %103 = vector.broadcast %cst_147 : f32 to vector<16x16xf32>
    %c0_i32_148 = arith.constant 0 : i32
    %c32_i32_149 = arith.constant 32 : i32
    %104 = arith.addi %c0_i32_148, %c32_i32_149 : i32
    %c1_i32_150 = arith.constant 1 : i32
    %105 = scf.for %arg10 = %c0_i32_148 to %104 step %c1_i32_150 iter_args(%arg11 = %103) -> (vector<16x16xf32>)  : i32 {
      %c32_i32_196 = arith.constant 32 : i32
      %137 = arith.addi %c32_i32_196, %arg10 : i32
      %c4 = arith.constant 4 : index
      %138 = arith.index_cast %137 : i32 to index
      %139 = memref.load %arg4[%c4, %138] : memref<9x64xf32, #tpu.memory_space<smem>>
      %140 = arith.index_cast %arg10 : i32 to index
      %c0_197 = arith.constant 0 : index
      %c0_198 = arith.constant 0 : index
      %141 = vector.load %arg8[%140, %c0_197, %c0_198] : memref<32x16x16xf32, #tpu.memory_space<vmem>>, vector<1x16x16xf32>
      %142 = vector.shape_cast %141 : vector<1x16x16xf32> to vector<16x16xf32>
      %143 = vector.broadcast %139 : f32 to vector<16x16xf32>
      %144 = arith.mulf %143, %142 : vector<16x16xf32>
      %145 = arith.addf %arg11, %144 : vector<16x16xf32>
      scf.yield %145 : vector<16x16xf32>
    }
    %c32_i32_151 = arith.constant 32 : i32
    %c8_152 = arith.constant 8 : index
    %c128_153 = arith.constant 128 : index
    %106 = vector.load %arg9[%c8_152, %c128_153] : memref<32x272xf32, #tpu.memory_space<vmem>>, vector<16x16xf32>
    tpu.vector_store %arg9[%c8_152, %c128_153], %105 {strides = array<i32>} : memref<32x272xf32, #tpu.memory_space<vmem>>, vector<16x16xf32>,
    %c8_154 = arith.constant 8 : index
    %c128_155 = arith.constant 128 : index
    %107 = vector.load %arg9[%c8_154, %c128_155] : memref<32x272xf32, #tpu.memory_space<vmem>>, vector<16x16xf32>
    %108 = arith.addf %102, %107 : vector<16x16xf32>
    %cst_156 = arith.constant 0.000000e+00 : f32
    %109 = vector.broadcast %cst_156 : f32 to vector<16x16xf32>
    %c0_i32_157 = arith.constant 0 : i32
    %c32_i32_158 = arith.constant 32 : i32
    %110 = arith.addi %c0_i32_157, %c32_i32_158 : i32
    %c1_i32_159 = arith.constant 1 : i32
    %111 = scf.for %arg10 = %c0_i32_157 to %110 step %c1_i32_159 iter_args(%arg11 = %109) -> (vector<16x16xf32>)  : i32 {
      %c32_i32_196 = arith.constant 32 : i32
      %137 = arith.addi %c32_i32_196, %arg10 : i32
      %c5 = arith.constant 5 : index
      %138 = arith.index_cast %137 : i32 to index
      %139 = memref.load %arg4[%c5, %138] : memref<9x64xf32, #tpu.memory_space<smem>>
      %140 = arith.index_cast %arg10 : i32 to index
      %c0_197 = arith.constant 0 : index
      %c0_198 = arith.constant 0 : index
      %141 = vector.load %arg8[%140, %c0_197, %c0_198] : memref<32x16x16xf32, #tpu.memory_space<vmem>>, vector<1x16x16xf32>
      %142 = vector.shape_cast %141 : vector<1x16x16xf32> to vector<16x16xf32>
      %143 = vector.broadcast %139 : f32 to vector<16x16xf32>
      %144 = arith.mulf %143, %142 : vector<16x16xf32>
      %145 = arith.addf %arg11, %144 : vector<16x16xf32>
      scf.yield %145 : vector<16x16xf32>
    }
    %c32_i32_160 = arith.constant 32 : i32
    %c8_161 = arith.constant 8 : index
    %c128_162 = arith.constant 128 : index
    %112 = vector.load %arg9[%c8_161, %c128_162] : memref<32x272xf32, #tpu.memory_space<vmem>>, vector<16x16xf32>
    tpu.vector_store %arg9[%c8_161, %c128_162], %111 {strides = array<i32>} : memref<32x272xf32, #tpu.memory_space<vmem>>, vector<16x16xf32>,
    %c8_163 = arith.constant 8 : index
    %c129_164 = arith.constant 129 : index
    %113 = vector.load %arg9[%c8_163, %c129_164] : memref<32x272xf32, #tpu.memory_space<vmem>>, vector<16x16xf32>
    %114 = arith.addf %108, %113 : vector<16x16xf32>
    %cst_165 = arith.constant 0.000000e+00 : f32
    %115 = vector.broadcast %cst_165 : f32 to vector<16x16xf32>
    %c0_i32_166 = arith.constant 0 : i32
    %c32_i32_167 = arith.constant 32 : i32
    %116 = arith.addi %c0_i32_166, %c32_i32_167 : i32
    %c1_i32_168 = arith.constant 1 : i32
    %117 = scf.for %arg10 = %c0_i32_166 to %116 step %c1_i32_168 iter_args(%arg11 = %115) -> (vector<16x16xf32>)  : i32 {
      %c32_i32_196 = arith.constant 32 : i32
      %137 = arith.addi %c32_i32_196, %arg10 : i32
      %c6 = arith.constant 6 : index
      %138 = arith.index_cast %137 : i32 to index
      %139 = memref.load %arg4[%c6, %138] : memref<9x64xf32, #tpu.memory_space<smem>>
      %140 = arith.index_cast %arg10 : i32 to index
      %c0_197 = arith.constant 0 : index
      %c0_198 = arith.constant 0 : index
      %141 = vector.load %arg8[%140, %c0_197, %c0_198] : memref<32x16x16xf32, #tpu.memory_space<vmem>>, vector<1x16x16xf32>
      %142 = vector.shape_cast %141 : vector<1x16x16xf32> to vector<16x16xf32>
      %143 = vector.broadcast %139 : f32 to vector<16x16xf32>
      %144 = arith.mulf %143, %142 : vector<16x16xf32>
      %145 = arith.addf %arg11, %144 : vector<16x16xf32>
      scf.yield %145 : vector<16x16xf32>
    }
    %c32_i32_169 = arith.constant 32 : i32
    %c8_170 = arith.constant 8 : index
    %c128_171 = arith.constant 128 : index
    %118 = vector.load %arg9[%c8_170, %c128_171] : memref<32x272xf32, #tpu.memory_space<vmem>>, vector<16x16xf32>
    tpu.vector_store %arg9[%c8_170, %c128_171], %117 {strides = array<i32>} : memref<32x272xf32, #tpu.memory_space<vmem>>, vector<16x16xf32>,
    %c9_172 = arith.constant 9 : index
    %c127_173 = arith.constant 127 : index
    %119 = vector.load %arg9[%c9_172, %c127_173] : memref<32x272xf32, #tpu.memory_space<vmem>>, vector<16x16xf32>
    %120 = arith.addf %114, %119 : vector<16x16xf32>
    %cst_174 = arith.constant 0.000000e+00 : f32
    %121 = vector.broadcast %cst_174 : f32 to vector<16x16xf32>
    %c0_i32_175 = arith.constant 0 : i32
    %c32_i32_176 = arith.constant 32 : i32
    %122 = arith.addi %c0_i32_175, %c32_i32_176 : i32
    %c1_i32_177 = arith.constant 1 : i32
    %123 = scf.for %arg10 = %c0_i32_175 to %122 step %c1_i32_177 iter_args(%arg11 = %121) -> (vector<16x16xf32>)  : i32 {
      %c32_i32_196 = arith.constant 32 : i32
      %137 = arith.addi %c32_i32_196, %arg10 : i32
      %c7_197 = arith.constant 7 : index
      %138 = arith.index_cast %137 : i32 to index
      %139 = memref.load %arg4[%c7_197, %138] : memref<9x64xf32, #tpu.memory_space<smem>>
      %140 = arith.index_cast %arg10 : i32 to index
      %c0_198 = arith.constant 0 : index
      %c0_199 = arith.constant 0 : index
      %141 = vector.load %arg8[%140, %c0_198, %c0_199] : memref<32x16x16xf32, #tpu.memory_space<vmem>>, vector<1x16x16xf32>
      %142 = vector.shape_cast %141 : vector<1x16x16xf32> to vector<16x16xf32>
      %143 = vector.broadcast %139 : f32 to vector<16x16xf32>
      %144 = arith.mulf %143, %142 : vector<16x16xf32>
      %145 = arith.addf %arg11, %144 : vector<16x16xf32>
      scf.yield %145 : vector<16x16xf32>
    }
    %c32_i32_178 = arith.constant 32 : i32
    %c8_179 = arith.constant 8 : index
    %c128_180 = arith.constant 128 : index
    %124 = vector.load %arg9[%c8_179, %c128_180] : memref<32x272xf32, #tpu.memory_space<vmem>>, vector<16x16xf32>
    tpu.vector_store %arg9[%c8_179, %c128_180], %123 {strides = array<i32>} : memref<32x272xf32, #tpu.memory_space<vmem>>, vector<16x16xf32>,
    %c9_181 = arith.constant 9 : index
    %c128_182 = arith.constant 128 : index
    %125 = vector.load %arg9[%c9_181, %c128_182] : memref<32x272xf32, #tpu.memory_space<vmem>>, vector<16x16xf32>
    %126 = arith.addf %120, %125 : vector<16x16xf32>
    %cst_183 = arith.constant 0.000000e+00 : f32
    %127 = vector.broadcast %cst_183 : f32 to vector<16x16xf32>
    %c0_i32_184 = arith.constant 0 : i32
    %c32_i32_185 = arith.constant 32 : i32
    %128 = arith.addi %c0_i32_184, %c32_i32_185 : i32
    %c1_i32_186 = arith.constant 1 : i32
    %129 = scf.for %arg10 = %c0_i32_184 to %128 step %c1_i32_186 iter_args(%arg11 = %127) -> (vector<16x16xf32>)  : i32 {
      %c32_i32_196 = arith.constant 32 : i32
      %137 = arith.addi %c32_i32_196, %arg10 : i32
      %c8_197 = arith.constant 8 : index
      %138 = arith.index_cast %137 : i32 to index
      %139 = memref.load %arg4[%c8_197, %138] : memref<9x64xf32, #tpu.memory_space<smem>>
      %140 = arith.index_cast %arg10 : i32 to index
      %c0_198 = arith.constant 0 : index
      %c0_199 = arith.constant 0 : index
      %141 = vector.load %arg8[%140, %c0_198, %c0_199] : memref<32x16x16xf32, #tpu.memory_space<vmem>>, vector<1x16x16xf32>
      %142 = vector.shape_cast %141 : vector<1x16x16xf32> to vector<16x16xf32>
      %143 = vector.broadcast %139 : f32 to vector<16x16xf32>
      %144 = arith.mulf %143, %142 : vector<16x16xf32>
      %145 = arith.addf %arg11, %144 : vector<16x16xf32>
      scf.yield %145 : vector<16x16xf32>
    }
    %c32_i32_187 = arith.constant 32 : i32
    %c8_188 = arith.constant 8 : index
    %c128_189 = arith.constant 128 : index
    %130 = vector.load %arg9[%c8_188, %c128_189] : memref<32x272xf32, #tpu.memory_space<vmem>>, vector<16x16xf32>
    tpu.vector_store %arg9[%c8_188, %c128_189], %129 {strides = array<i32>} : memref<32x272xf32, #tpu.memory_space<vmem>>, vector<16x16xf32>,
    %c9_190 = arith.constant 9 : index
    %c129_191 = arith.constant 129 : index
    %131 = vector.load %arg9[%c9_190, %c129_191] : memref<32x272xf32, #tpu.memory_space<vmem>>, vector<16x16xf32>
    %132 = arith.addf %126, %131 : vector<16x16xf32>
    %133 = math.tanh %132 : vector<16x16xf32>
    %c0_192 = arith.constant 0 : index
    %c1_193 = arith.constant 1 : index
    %c0_194 = arith.constant 0 : index
    %c0_195 = arith.constant 0 : index
    %134 = vector.load %arg6[%c0_192, %c1_193, %c0_194, %c0_195] : memref<1x2x16x16xf32, #tpu.memory_space<vmem>>, vector<1x1x16x16xf32>
    %135 = vector.shape_cast %134 : vector<1x1x16x16xf32> to vector<16x16xf32>
    %136 = vector.shape_cast %133 : vector<16x16xf32> to vector<1x1x16x16xf32>
    tpu.vector_store %arg6[%c0_192, %c1_193, %c0_194, %c0_195], %136 {strides = array<i32>} : memref<1x2x16x16xf32, #tpu.memory_space<vmem>>, vector<1x1x16x16xf32>,
    return
  }
  func.func @transform_0(%arg0: i32) -> (i32, i32, i32, i32) {
    %c0_i32 = arith.constant 0 : i32
    %c0_i32_0 = arith.constant 0 : i32
    %c0_i32_1 = arith.constant 0 : i32
    %c0_i32_2 = arith.constant 0 : i32
    return %arg0, %c0_i32, %c0_i32_0, %c0_i32_1 : i32, i32, i32, i32
  }
  func.func @transform_1(%arg0: i32) -> (i32, i32) {
    %c0_i32 = arith.constant 0 : i32
    %c0_i32_0 = arith.constant 0 : i32
    %c0_i32_1 = arith.constant 0 : i32
    return %c0_i32, %c0_i32_0 : i32, i32
  }
  func.func @transform_2(%arg0: i32) -> (i32, i32) {
    %c0_i32 = arith.constant 0 : i32
    %c0_i32_0 = arith.constant 0 : i32
    %c0_i32_1 = arith.constant 0 : i32
    return %c0_i32, %c0_i32_0 : i32, i32
  }
  func.func @transform_3(%arg0: i32) -> (i32, i32) {
    %c0_i32 = arith.constant 0 : i32
    %c0_i32_0 = arith.constant 0 : i32
    %c0_i32_1 = arith.constant 0 : i32
    return %c0_i32, %c0_i32_0 : i32, i32
  }
  func.func @transform_4(%arg0: i32) -> (i32, i32) {
    %c0_i32 = arith.constant 0 : i32
    %c0_i32_0 = arith.constant 0 : i32
    %c0_i32_1 = arith.constant 0 : i32
    return %c0_i32, %c0_i32_0 : i32, i32
  }
  func.func @transform_5(%arg0: i32) -> (i32, i32, i32, i32) {
    %c0_i32 = arith.constant 0 : i32
    %c0_i32_0 = arith.constant 0 : i32
    %c0_i32_1 = arith.constant 0 : i32
    %c0_i32_2 = arith.constant 0 : i32
    return %arg0, %c0_i32, %c0_i32_0, %c0_i32_1 : i32, i32, i32, i32
  }
}

</mosaic_0001>

<llo_original>
// kernel: main_model_forward.1
$region0: #{main_model_forward.1}
  #allocation0 [shape = 'u32[]', space=smem, size = 0x4, offset = 0x4, fixed_abs, tag = 'smem constant byte address 0x4 - core index']
  #allocation1 [shape = 'u32[144,128]{1,0:T(1,128)}', space=vmem, size = 0x12000, scoped, tag = 'internal scratch']
  #allocation2 [shape = 'f32[32,272]{1,0:T(8,128)}', space=vmem, size = 0xc000, scoped, tag = 'scratch operand']
  #allocation3 [shape = 'f32[32,16,16]{2,1,0:T(8,128)}', space=vmem, size = 0x40000, scoped, tag = 'scratch operand']
  #allocation4 [shape = 'f32[32,272]{1,0:T(8,128)}', space=vmem, size = 0xc000, scoped, tag = 'scratch operand']
  %s0 = inlined_call_operand.vmem [shape: f32[2,1,16,16], index: 0, kind: input, shape index: {}]
  %s1 = inlined_call_operand.vmem [shape: f32[9,32], index: 1, kind: input, shape index: {}]
  %s2 = inlined_call_operand.vmem [shape: f32[1,32], index: 2, kind: input, shape index: {}]
  %s3 = inlined_call_operand.vmem [shape: f32[9,64], index: 3, kind: input, shape index: {}]
  %s4 = inlined_call_operand.vmem [shape: f32[1,2], index: 4, kind: input, shape index: {}]
  %s5 = inlined_call_operand.hbm [shape: f32[2,2,16,16], index: 5, kind: output, shape index: {}]
  %s6 = sld [smem:[#allocation0]]
  $region202: #{main_model_forward.1} parent=0
    _
  %s8 = ssub.s32 1, %s6
  %s9 = scalar_select 0, %s8, %s6
  $region1: #{main_model_forward.1} parent=0
    #allocation5 [shape = 'u8[8192]{0}', space=smem, size = 0x2000, scoped, tag = 'input window, operand 1, single buffered']
    #allocation6 [shape = 's32[2]{0}', space=sflag, size = 0x8, scoped, tag = 'scoped memory for main_model_forward.1']
    #allocation7 [shape = 's32[2]{0}', space=sflag, size = 0x8, scoped, tag = 'scoped memory for main_model_forward.1']
    #allocation8 [shape = 'u8[512]{0}', space=smem, size = 0x200, scoped, tag = 'input window, operand 2, single buffered']
    #allocation9 [shape = 's32[1]{0}', space=sflag, size = 0x4, scoped, tag = 'scoped memory for main_model_forward.1']
    #allocation10 [shape = 'u8[8192]{0}', space=smem, size = 0x2000, scoped, tag = 'input window, operand 3, single buffered']
    #allocation11 [shape = 'u8[512]{0}', space=smem, size = 0x200, scoped, tag = 'input window, operand 4, single buffered']
    #allocation12 [shape = 's32[1]{0}', space=sflag, size = 0x4, scoped, tag = 'scoped memory for main_model_forward.1']
    #allocation13 [shape = 'u8[32768]{0}', space=vmem, size = 0x8000, scoped, tag = 'output window, operand 0']
    %10 = vsyncpa [#allocation7], 0
    %11 = vsyncpa [#allocation9], 0
    %12 = vsyncpa [#allocation12], 0
    %13 = vsyncpa [#allocation6], 0
    %s14 = scalar_lea.sflag [#allocation6], 1
    %15 = vsyncpa %s14, 0
    loop: start=0, step=1, limit=4
    $region2: #{main_model_forward.1} parent=1 // loop_pre_header
      _
    $region3: #{main_model_forward.1} parent=1 // loop_header
      %s17 = sphi 0, %s21
      %p18 = scmp.ge.s32.totalorder %s17, 4
      %s27 = sphi 0, %s29
      %s30 = sphi 0, %s27
      %s31 = sphi 0, %s30
      %s47 = sphi 0, %s31
      %s51 = sphi 0, %s51
      %s53 = sphi 0, %s51
      %s54 = sphi 0, %s53
      %s68 = sphi 0, %s54
      %s72 = sphi 0, %s72
      %s74 = sphi 0, %s72
      %s75 = sphi 0, %s74
      %s89 = sphi 0, %s75
      %s93 = sphi 0, %s93
      %s95 = sphi 0, %s93
      %s96 = sphi 0, %s95
      %s110 = sphi 0, %s96
      %s114 = sphi 0, %s114
      %s116 = sphi 0, %s114
      %s117 = sphi 0, %s116
      %s131 = sphi 0, %s117
      %s137 = sphi 0, %s139
      %s140 = sphi 0, %s137
      %s141 = sphi 0, %s140
      %s157 = sphi 0, %s141
    $region4: #{main_model_forward.1} parent=1 // loop_header_branch
      %20 = sbr.rel (%p18) target = $region8
    $region5: #{main_model_forward.1} parent=1 // loop_body
      %s22 = ssub.s32 %s17, 1
      %s23 = ssub.s32 %s17, 2
      %s24 = sadd.s32 %s17, 1
      %s25 = ssub.s32 %s17, %s24
      %p26 = scmp.eq.s32.totalorder %s25, 0
      %s28 = sadd.s32 %s27, 1
      %s29 = scalar_select %p26, %s27, %s28
      %p32 = pneg %p26
      %p33 = scmp.eq.s32.totalorder %s17, 1
      %p34 = por %p32, %p33
      %p35 = scmp.ne.s32.totalorder %s27, %s30
      %p36 = scmp.eq.s32.totalorder %s17, 0
      %p37 = por %p35, %p36
      %p38 = scmp.ne.s32.totalorder %s27, %s30
      %p39 = scmp.eq.s32.totalorder %s22, 1
      %p40 = por %p38, %p39
      %p41 = scmp.ne.s32.totalorder %s30, %s31
      %p42 = scmp.eq.s32.totalorder %s22, 0
      %p43 = por %p41, %p42
      %p44 = scmp.ne.s32.totalorder %s30, %s31
      %p45 = scmp.eq.s32.totalorder %s23, 1
      %p46 = por %p44, %p45
      %p48 = scmp.ne.s32.totalorder %s31, %s47
      %p49 = scmp.eq.s32.totalorder %s23, 0
      %p50 = por %p48, %p49
      %s52 = sadd.s32 %s51, 1
      %p55 = scmp.eq.s32.totalorder %s17, 1
      %p56 = scmp.ne.s32.totalorder %s51, %s53
      %p57 = scmp.eq.s32.totalorder %s17, 0
      %p58 = por %p56, %p57
      %p59 = scmp.ne.s32.totalorder %s51, %s53
      %p60 = scmp.eq.s32.totalorder %s22, 1
      %p61 = por %p59, %p60
      %p62 = scmp.ne.s32.totalorder %s53, %s54
      %p63 = scmp.eq.s32.totalorder %s22, 0
      %p64 = por %p62, %p63
      %p65 = scmp.ne.s32.totalorder %s53, %s54
      %p66 = scmp.eq.s32.totalorder %s23, 1
      %p67 = por %p65, %p66
      %p69 = scmp.ne.s32.totalorder %s54, %s68
      %p70 = scmp.eq.s32.totalorder %s23, 0
      %p71 = por %p69, %p70
      %s73 = sadd.s32 %s72, 1
      %p76 = scmp.eq.s32.totalorder %s17, 1
      %p77 = scmp.ne.s32.totalorder %s72, %s74
      %p78 = scmp.eq.s32.totalorder %s17, 0
      %p79 = por %p77, %p78
      %p80 = scmp.ne.s32.totalorder %s72, %s74
      %p81 = scmp.eq.s32.totalorder %s22, 1
      %p82 = por %p80, %p81
      %p83 = scmp.ne.s32.totalorder %s74, %s75
      %p84 = scmp.eq.s32.totalorder %s22, 0
      %p85 = por %p83, %p84
      %p86 = scmp.ne.s32.totalorder %s74, %s75
      %p87 = scmp.eq.s32.totalorder %s23, 1
      %p88 = por %p86, %p87
      %p90 = scmp.ne.s32.totalorder %s75, %s89
      %p91 = scmp.eq.s32.totalorder %s23, 0
      %p92 = por %p90, %p91
      %s94 = sadd.s32 %s93, 1
      %p97 = scmp.eq.s32.totalorder %s17, 1
      %p98 = scmp.ne.s32.totalorder %s93, %s95
      %p99 = scmp.eq.s32.totalorder %s17, 0
      %p100 = por %p98, %p99
      %p101 = scmp.ne.s32.totalorder %s93, %s95
      %p102 = scmp.eq.s32.totalorder %s22, 1
      %p103 = por %p101, %p102
      %p104 = scmp.ne.s32.totalorder %s95, %s96
      %p105 = scmp.eq.s32.totalorder %s22, 0
      %p106 = por %p104, %p105
      %p107 = scmp.ne.s32.totalorder %s95, %s96
      %p108 = scmp.eq.s32.totalorder %s23, 1
      %p109 = por %p107, %p108
      %p111 = scmp.ne.s32.totalorder %s96, %s110
      %p112 = scmp.eq.s32.totalorder %s23, 0
      %p113 = por %p111, %p112
      %s115 = sadd.s32 %s114, 1
      %p118 = scmp.eq.s32.totalorder %s17, 1
      %p119 = scmp.ne.s32.totalorder %s114, %s116
      %p120 = scmp.eq.s32.totalorder %s17, 0
      %p121 = por %p119, %p120
      %p122 = scmp.ne.s32.totalorder %s114, %s116
      %p123 = scmp.eq.s32.totalorder %s22, 1
      %p124 = por %p122, %p123
      %p125 = scmp.ne.s32.totalorder %s116, %s117
      %p126 = scmp.eq.s32.totalorder %s22, 0
      %p127 = por %p125, %p126
      %p128 = scmp.ne.s32.totalorder %s116, %s117
      %p129 = scmp.eq.s32.totalorder %s23, 1
      %p130 = por %p128, %p129
      %p132 = scmp.ne.s32.totalorder %s117, %s131
      %p133 = scmp.eq.s32.totalorder %s23, 0
      %p134 = por %p132, %p133
      %s135 = ssub.s32 %s17, %s24
      %p136 = scmp.eq.s32.totalorder %s135, 0
      %s138 = sadd.s32 %s137, 1
      %s139 = scalar_select %p136, %s137, %s138
      %p142 = pneg %p136
      %p143 = scmp.eq.s32.totalorder %s17, 1
      %p144 = por %p142, %p143
      %p145 = scmp.ne.s32.totalorder %s137, %s140
      %p146 = scmp.eq.s32.totalorder %s17, 0
      %p147 = por %p145, %p146
      %p148 = scmp.ne.s32.totalorder %s137, %s140
      %p149 = scmp.eq.s32.totalorder %s22, 1
      %p150 = por %p148, %p149
      %p151 = scmp.ne.s32.totalorder %s140, %s141
      %p152 = scmp.eq.s32.totalorder %s22, 0
      %p153 = por %p151, %p152
      %p154 = scmp.ne.s32.totalorder %s140, %s141
      %p155 = scmp.eq.s32.totalorder %s23, 1
      %p156 = por %p154, %p155
      %p158 = scmp.ne.s32.totalorder %s141, %s157
      %p159 = scmp.eq.s32.totalorder %s23, 0
      %p160 = por %p158, %p159
      %p161 = scmp.le.s32.totalorder 1, %s17
      %p162 = scmp.lt.s32.totalorder %s17, 3
      %p163 = pnand %p161, %p162
      %p164 = pneg %p163
      // Predicated region
      $region9: #{main_model_forward.1} parent=5 // pred_check
        _
      $region10: #{main_model_forward.1} parent=5 // pred_check_branch
        %166 = sbr.rel (%p163) target = $region12
      $region11: #{main_model_forward.1} parent=5 // pred_region
        %s167 = ssub.s32 %s17, 1
        // Predicated region
        $region13: #{main_model_forward.1} parent=11 // pred_check
          %p168 = pneg %p64
        $region14: #{main_model_forward.1} parent=11 // pred_check_branch
          %170 = sbr.rel (%p168) target = $region16
        $region15: #{main_model_forward.1} parent=11 // pred_region
          %s172 = ssub.s32 256, 256
          %173 = vsyncadd [#allocation7], %s172
          %s174 = sshll.u32 %s1, 4
          %s175 = int_to_ptr.vmem [resolvable:$true] %s174
          %180 = dma.vmem_to_smem %s175, 256, [#allocation5], [#allocation7], 128, 128, 8
        $region16: #{main_model_forward.1} parent=11 // pred_fallthru
          _
        // Predicated region
        $region17: #{main_model_forward.1} parent=11 // pred_check
          %p181 = pneg %p85
        $region18: #{main_model_forward.1} parent=11 // pred_check_branch
          %183 = sbr.rel (%p181) target = $region20
        $region19: #{main_model_forward.1} parent=11 // pred_region
          %s185 = ssub.s32 16, 16
          %186 = vsyncadd [#allocation9], %s185
          %s188 = sshll.u32 %s2, 4
          %s189 = int_to_ptr.vmem [resolvable:$true] %s188
          %191 = dma.vmem_to_smem %s189, 16, [#allocation8], [#allocation9]
        $region20: #{main_model_forward.1} parent=11 // pred_fallthru
          _
        // Predicated region
        $region21: #{main_model_forward.1} parent=11 // pred_check
          %p192 = pneg %p106
        $region22: #{main_model_forward.1} parent=11 // pred_check_branch
          %194 = sbr.rel (%p192) target = $region24
        $region23: #{main_model_forward.1} parent=11 // pred_region
          %s196 = ssub.s32 256, 256
          %197 = vsyncadd [#allocation9], %s196
          %s198 = sshll.u32 %s3, 4
          %s199 = int_to_ptr.vmem [resolvable:$true] %s198
          %204 = dma.vmem_to_smem %s199, 256, [#allocation10], [#allocation9], 128, 128, 8
        $region24: #{main_model_forward.1} parent=11 // pred_fallthru
          _
        // Predicated region
        $region25: #{main_model_forward.1} parent=11 // pred_check
          %p205 = pneg %p127
        $region26: #{main_model_forward.1} parent=11 // pred_check_branch
          %207 = sbr.rel (%p205) target = $region28
        $region27: #{main_model_forward.1} parent=11 // pred_region
          %s209 = ssub.s32 16, 16
          %210 = vsyncadd [#allocation12], %s209
          %s212 = sshll.u32 %s4, 4
          %s213 = int_to_ptr.vmem [resolvable:$true] %s212
          %215 = dma.vmem_to_smem %s213, 16, [#allocation11], [#allocation12]
        $region28: #{main_model_forward.1} parent=11 // pred_fallthru
          _
      $region12: #{main_model_forward.1} parent=5 // pred_fallthru
        _
      %p216 = scmp.lt.s32.totalorder %s17, 2
      // Predicated region
      $region29: #{main_model_forward.1} parent=5 // pred_check
        %p217 = pneg %p216
      $region30: #{main_model_forward.1} parent=5 // pred_check_branch
        %219 = sbr.rel (%p217) target = $region32
      $region31: #{main_model_forward.1} parent=5 // pred_region
        // Predicated region
        $region33: #{main_model_forward.1} parent=31 // pred_check
          %p220 = pneg %p37
        $region34: #{main_model_forward.1} parent=31 // pred_check_branch
          %222 = sbr.rel (%p220) target = $region36
        $region35: #{main_model_forward.1} parent=31 // pred_region
          %p223 = scmp.lt.s32.totalorder %s17, 1
          %s224 = scalar_select %p223, %s17, 1
          %s225 = smul.addr %s224, 2
          %s226 = smul.addr %s225, 8
          %s227 = scalar_lea.vmem %s0, %s226
        $region36: #{main_model_forward.1} parent=31 // pred_fallthru
          _
      $region32: #{main_model_forward.1} parent=5 // pred_fallthru
        _
      %p228 = scmp.le.s32.totalorder 1, %s17
      %p229 = scmp.lt.s32.totalorder %s17, 3
      %p230 = pnand %p228, %p229
      %p231 = pneg %p230
      // Predicated region
      $region37: #{main_model_forward.1} parent=5 // pred_check
        _
      $region38: #{main_model_forward.1} parent=5 // pred_check_branch
        %233 = sbr.rel (%p230) target = $region40
      $region39: #{main_model_forward.1} parent=5 // pred_region
        %s234 = ssub.s32 %s17, 1
        // Predicated region
        $region41: #{main_model_forward.1} parent=39 // pred_check
          %p235 = pneg %p64
        $region42: #{main_model_forward.1} parent=39 // pred_check_branch
          %237 = sbr.rel (%p235) target = $region44
        $region43: #{main_model_forward.1} parent=39 // pred_region
          %238 = dma.done [#allocation7], 256
        $region44: #{main_model_forward.1} parent=39 // pred_fallthru
          _
        // Predicated region
        $region45: #{main_model_forward.1} parent=39 // pred_check
          %p239 = pneg %p85
        $region46: #{main_model_forward.1} parent=39 // pred_check_branch
          %241 = sbr.rel (%p239) target = $region48
        $region47: #{main_model_forward.1} parent=39 // pred_region
          %242 = dma.done [#allocation9], 16
        $region48: #{main_model_forward.1} parent=39 // pred_fallthru
          _
        // Predicated region
        $region49: #{main_model_forward.1} parent=39 // pred_check
          %p243 = pneg %p106
        $region50: #{main_model_forward.1} parent=39 // pred_check_branch
          %245 = sbr.rel (%p243) target = $region52
        $region51: #{main_model_forward.1} parent=39 // pred_region
          %246 = dma.done [#allocation9], 256
        $region52: #{main_model_forward.1} parent=39 // pred_fallthru
          _
        // Predicated region
        $region53: #{main_model_forward.1} parent=39 // pred_check
          %p247 = pneg %p127
        $region54: #{main_model_forward.1} parent=39 // pred_check_branch
          %249 = sbr.rel (%p247) target = $region56
        $region55: #{main_model_forward.1} parent=39 // pred_region
          %250 = dma.done [#allocation12], 16
        $region56: #{main_model_forward.1} parent=39 // pred_fallthru
          _
        %251 = sfence
        %p252 = scmp.lt.s32.totalorder %s22, 1
        %s253 = scalar_select %p252, %s22, 1
        %s254 = smul.addr %s253, 2
        %s255 = smul.addr %s254, 8
        %s256 = scalar_lea.vmem %s0, %s255
        %p257 = pneg %p43
        %p258 = pneg %p40
        %p259 = pneg %p64
        %p260 = pneg %p61
        %p261 = pneg %p85
        %p262 = pneg %p82
        %p263 = pneg %p106
        %p264 = pneg %p103
        %p265 = pneg %p127
        %p266 = pneg %p124
        %p267 = pneg %p153
        %p268 = pneg %p150
        %s269 = sand.u32 %s140, 1
        %s270 = scalar_lea.sflag [#allocation6], %s269
        %s271 = sand.u32 %s140, 1
        %s272 = smul.addr %s271, 32
        %s273 = scalar_lea.vmem [#allocation13], %s272
        %p274 = scmp.lt.s32.totalorder %s22, 1
        %s275 = scalar_select %p274, %s22, 1
        %s276 = smul.addr %s275, 2
        %s277 = smul.addr %s276, 8
        %s278 = scalar_lea.vmem %s0, %s277
        %279 = vst [vmem:[#allocation2] sm:$0xff] 0.0
        %280 = vst [vmem:[#allocation2 + $0x8] sm:$0xff] 0.0
        %vm281 = vcmask 130048
        %282 = vst.msk [vmem:[#allocation2 + $0x10] sm:$0xff] %vm281, 0.0
        %283 = vst [vmem:[#allocation2 + $0x18] sm:$0xff] 0.0
        %284 = vst [vmem:[#allocation2 + $0x20] sm:$0xff] 0.0
        %285 = vst.msk [vmem:[#allocation2 + $0x28] sm:$0xff] %vm281, 0.0
        %286 = vst [vmem:[#allocation2 + $0x30] sm:$0xff] 0.0
        %287 = vst [vmem:[#allocation2 + $0x38] sm:$0xff] 0.0
        %288 = vst.msk [vmem:[#allocation2 + $0x40] sm:$0xff] %vm281, 0.0
        %289 = vst [vmem:[#allocation2 + $0x48] sm:$0xff] 0.0
        %290 = vst [vmem:[#allocation2 + $0x50] sm:$0xff] 0.0
        %291 = vst.msk [vmem:[#allocation2 + $0x58] sm:$0xff] %vm281, 0.0
        %v292 = vld [vmem:[%s278] sm:$0xff]
        %v293 = vld [vmem:[%s278 + $0x8] sm:$0xff]
        %294 = vst.msk [vmem:[#allocation2 + $0x20] sm:$0xff] %vm281, %v292
        %295 = vst.msk [vmem:[#allocation2 + $0x38] sm:$0xff] %vm281, %v293
        %v296 = vld [vmem:[#allocation2] sm:$0x80]
        %v297 = vld [vmem:[#allocation2 + $0x8] sm:$0x80]
        %v298 = vld [vmem:[#allocation2 + $0x18] sm:$0xff]
        %v299 = vld [vmem:[#allocation2 + $0x20] sm:$0xff]
        %v300 = vld [vmem:[#allocation2 + $0x30] sm:$0x7f]
        %v301 = vld [vmem:[#allocation2 + $0x38] sm:$0x7f]
        %v302 = vld [vmem:[#allocation2 + $0x30] sm:$0xff]
        %v303 = vld [vmem:[#allocation2 + $0x38] sm:$0xff]
        %v304 = vld [vmem:[#allocation2 + $0x18] sm:$0xfe]
        %v305 = vld [vmem:[#allocation2 + $0x20] sm:$0xfe]
        %v306 = vld [vmem:[#allocation2 + $0x48] sm:$0x1]
        %v307 = vld [vmem:[#allocation2 + $0x50] sm:$0x1]
        loop: start=0, step=1, limit=32
        $region57: #{main_model_forward.1} parent=39 // loop_pre_header
          _
        $region58: #{main_model_forward.1} parent=39 // loop_header
          %s309 = sphi 0, %s313
          %p310 = scmp.ge.s32.totalorder %s309, 32
        $region59: #{main_model_forward.1} parent=39 // loop_header_branch
          %312 = sbr.rel (%p310) target = $region63
        $region60: #{main_model_forward.1} parent=39 // loop_body
          %s314 = sld [smem:[#allocation8 + %s309]]
          %v315 = vstv %s314
          %s316 = sld [smem:[#allocation5 + %s309]]
          %v317 = vstv %s316
          %v318 = vmul.f32 %v317, %v296
          %v319 = vmul.f32 %v317, %v297
          %v320 = vmul.f32 %v317, %v298
          %v321 = vmul.f32 %v317, %v299
          %v322 = vmul.f32 %v317, %v300
          %v323 = vmul.f32 %v317, %v301
          %v324 = vadd.f32 %v315, %v318
          %v325 = vadd.f32 %v315, %v319
          %v326 = vadd.f32 %v315, %v320
          %v327 = vadd.f32 %v315, %v321
          %v328 = vadd.f32 %v315, %v322
          %v329 = vadd.f32 %v315, %v323
          %s330 = sshra.s32 %s309, 7
          %s331 = sand.u32 %s309, 127
          %s332 = sadd.s32 %s330, 1
          %s333 = smul.u32 %s332, 128
          %s334 = sshra.s32 %s309, 7
          %s335 = sand.u32 %s309, 127
          %s336 = sadd.s32 %s333, %s335
          %s337 = sld [smem:[#allocation5 + %s336]]
          %v338 = vstv %s337
          %v339 = vmul.f32 %v338, %v297
          %v340 = vmul.f32 %v338, %v299
          %v341 = vmul.f32 %v338, %v301
          %345 = vrot.lane.b32.xlu0 %v339, 127
          %v346 = vpop.permute.xlu0 %345
          %347 = vrot.lane.b32.xlu0 %v340, 127
          %v348 = vpop.permute.xlu0 %347
          %349 = vrot.lane.b32.xlu0 %v341, 127
          %v350 = vpop.permute.xlu0 %349
          %v354 = vadd.f32 %v324, %v346
          %v355 = vadd.f32 %v325, %v346
          %v356 = vadd.f32 %v326, %v348
          %v357 = vadd.f32 %v327, %v348
          %v358 = vadd.f32 %v328, %v350
          %v359 = vadd.f32 %v329, %v350
          %s360 = sadd.s32 %s330, 2
          %s361 = smul.u32 %s360, 128
          %s362 = sadd.s32 %s361, %s335
          %s363 = sld [smem:[#allocation5 + %s362]]
          %v364 = vstv %s363
          %v365 = vmul.f32 %v364, %v297
          %v366 = vmul.f32 %v364, %v299
          %v367 = vmul.f32 %v364, %v301
          %371 = vrot.lane.b32.xlu0 %v365, 126
          %v372 = vpop.permute.xlu0 %371
          %373 = vrot.lane.b32.xlu0 %v366, 126
          %v374 = vpop.permute.xlu0 %373
          %375 = vrot.lane.b32.xlu0 %v367, 126
          %v376 = vpop.permute.xlu0 %375
          %v380 = vadd.f32 %v354, %v372
          %v381 = vadd.f32 %v355, %v372
          %v382 = vadd.f32 %v356, %v374
          %v383 = vadd.f32 %v357, %v374
          %v384 = vadd.f32 %v358, %v376
          %v385 = vadd.f32 %v359, %v376
          %s386 = sadd.s32 %s330, 3
          %s387 = smul.u32 %s386, 128
          %s388 = sadd.s32 %s387, %s335
          %s389 = sld [smem:[#allocation5 + %s388]]
          %v390 = vstv %s389
          %v391 = vmul.f32 %v390, %v298
          %v392 = vmul.f32 %v390, %v299
          %v393 = vmul.f32 %v390, %v302
          %v394 = vmul.f32 %v390, %v303
          %vm399 = vcmask 1046528
          %v400 = vrot.slane %v391, 1
          %v401 = vrot.slane %v392, 1
          %v402 = vrot.slane %v393, 1
          %v403 = vsel %vm399, %v400, %v402
          %v404 = vrot.slane %v394, 1
          %v405 = vsel %vm399, %v401, %v404
          %v412 = vadd.f32 %v380, %v400
          %v413 = vadd.f32 %v381, %v401
          %v414 = vadd.f32 %v382, %v403
          %v415 = vadd.f32 %v383, %v405
          %v416 = vadd.f32 %v384, %v402
          %v417 = vadd.f32 %v385, %v404
          %s418 = sadd.s32 %s330, 4
          %s419 = smul.u32 %s418, 128
          %s420 = sadd.s32 %s419, %s335
          %s421 = sld [smem:[#allocation5 + %s420]]
          %v422 = vstv %s421
          %v423 = vmul.f32 %v422, %v299
          %v424 = vmul.f32 %v422, %v303
          %v427 = vrot.slane %v423, 1
          %v428 = vrot.slane %v424, 1
          %v429 = vsel %vm399, %v427, %v428
          %430 = vrot.lane.b32.xlu0 %v427, 127
          %v431 = vpop.permute.xlu0 %430
          %432 = vrot.lane.b32.xlu0 %v429, 127
          %v433 = vpop.permute.xlu0 %432
          %434 = vrot.lane.b32.xlu0 %v428, 127
          %v435 = vpop.permute.xlu0 %434
          %v439 = vadd.f32 %v412, %v431
          %v440 = vadd.f32 %v413, %v431
          %v441 = vadd.f32 %v414, %v433
          %v442 = vadd.f32 %v415, %v433
          %v443 = vadd.f32 %v416, %v435
          %v444 = vadd.f32 %v417, %v435
          %s445 = sadd.s32 %s330, 5
          %s446 = smul.u32 %s445, 128
          %s447 = sadd.s32 %s446, %s335
          %s448 = sld [smem:[#allocation5 + %s447]]
          %v449 = vstv %s448
          %v450 = vmul.f32 %v449, %v299
          %v451 = vmul.f32 %v449, %v303
          %v454 = vrot.slane %v450, 1
          %v455 = vrot.slane %v451, 1
          %v456 = vsel %vm399, %v454, %v455
          %457 = vrot.lane.b32.xlu0 %v454, 126
          %v458 = vpop.permute.xlu0 %457
          %459 = vrot.lane.b32.xlu0 %v456, 126
          %v460 = vpop.permute.xlu0 %459
          %461 = vrot.lane.b32.xlu0 %v455, 126
          %v462 = vpop.permute.xlu0 %461
          %v466 = vadd.f32 %v439, %v458
          %v467 = vadd.f32 %v440, %v458
          %v468 = vadd.f32 %v441, %v460
          %v469 = vadd.f32 %v442, %v460
          %v470 = vadd.f32 %v443, %v462
          %v471 = vadd.f32 %v444, %v462
          %s472 = sadd.s32 %s330, 6
          %s473 = smul.u32 %s472, 128
          %s474 = sadd.s32 %s473, %s335
          %s475 = sld [smem:[#allocation5 + %s474]]
          %v476 = vstv %s475
          %v477 = vmul.f32 %v476, %v304
          %v478 = vmul.f32 %v476, %v305
          %v479 = vmul.f32 %v476, %v302
          %v480 = vmul.f32 %v476, %v303
          %v481 = vmul.f32 %v476, %v306
          %v482 = vmul.f32 %v476, %v307
          %vm489 = vcmask 1045504
          %v490 = vrot.slane %v477, 2
          %v491 = vrot.slane %v478, 2
          %v492 = vrot.slane %v479, 2
          %v493 = vsel %vm489, %v490, %v492
          %v494 = vrot.slane %v480, 2
          %v495 = vsel %vm489, %v491, %v494
          %v496 = vrot.slane %v481, 2
          %v497 = vsel %vm489, %v492, %v496
          %v498 = vrot.slane %v482, 2
          %v499 = vsel %vm489, %v494, %v498
          %v506 = vadd.f32 %v466, %v490
          %v507 = vadd.f32 %v467, %v491
          %v508 = vadd.f32 %v468, %v493
          %v509 = vadd.f32 %v469, %v495
          %v510 = vadd.f32 %v470, %v497
          %v511 = vadd.f32 %v471, %v499
          %s512 = sadd.s32 %s330, 7
          %s513 = smul.u32 %s512, 128
          %s514 = sadd.s32 %s513, %s335
          %s515 = sld [smem:[#allocation5 + %s514]]
          %v516 = vstv %s515
          %v517 = vmul.f32 %v516, %v305
          %v518 = vmul.f32 %v516, %v303
          %v519 = vmul.f32 %v516, %v307
          %v523 = vrot.slane %v517, 2
          %v524 = vrot.slane %v518, 2
          %v525 = vsel %vm489, %v523, %v524
          %v526 = vrot.slane %v519, 2
          %v527 = vsel %vm489, %v524, %v526
          %528 = vrot.lane.b32.xlu0 %v523, 127
          %v529 = vpop.permute.xlu0 %528
          %530 = vrot.lane.b32.xlu0 %v525, 127
          %v531 = vpop.permute.xlu0 %530
          %532 = vrot.lane.b32.xlu0 %v527, 127
          %v533 = vpop.permute.xlu0 %532
          %v537 = vadd.f32 %v506, %v529
          %v538 = vadd.f32 %v507, %v529
          %v539 = vadd.f32 %v508, %v531
          %v540 = vadd.f32 %v509, %v531
          %v541 = vadd.f32 %v510, %v533
          %v542 = vadd.f32 %v511, %v533
          %s543 = sadd.s32 %s330, 8
          %s544 = smul.u32 %s543, 128
          %s545 = sadd.s32 %s544, %s335
          %s546 = sld [smem:[#allocation5 + %s545]]
          %v547 = vstv %s546
          %v548 = vmul.f32 %v547, %v305
          %v549 = vmul.f32 %v547, %v303
          %v550 = vmul.f32 %v547, %v307
          %v554 = vrot.slane %v548, 2
          %v555 = vrot.slane %v549, 2
          %v556 = vsel %vm489, %v554, %v555
          %v557 = vrot.slane %v550, 2
          %v558 = vsel %vm489, %v555, %v557
          %559 = vrot.lane.b32.xlu0 %v554, 126
          %v560 = vpop.permute.xlu0 %559
          %561 = vrot.lane.b32.xlu0 %v556, 126
          %v562 = vpop.permute.xlu0 %561
          %563 = vrot.lane.b32.xlu0 %v558, 126
          %v564 = vpop.permute.xlu0 %563
          %v568 = vadd.f32 %v537, %v560
          %v569 = vadd.f32 %v538, %v560
          %v570 = vadd.f32 %v539, %v562
          %v571 = vadd.f32 %v540, %v562
          %v572 = vadd.f32 %v541, %v564
          %v573 = vadd.f32 %v542, %v564
          %v574 = vmax.f32 %v568, 0.0
          %v575 = vmax.f32 %v569, 0.0
          %v576 = vmax.f32 %v570, 0.0
          %v577 = vmax.f32 %v571, 0.0
          %v578 = vmax.f32 %v572, 0.0
          %v579 = vmax.f32 %v573, 0.0
          %586 = vrot.lane.b32.xlu0 %v574, 1
          %v587 = vpop.permute.xlu0 %586
          %588 = vrot.lane.b32.xlu0 %v575, 1
          %v589 = vpop.permute.xlu0 %588
          %590 = vrot.lane.b32.xlu0 %v576, 1
          %v591 = vpop.permute.xlu0 %590
          %592 = vrot.lane.b32.xlu0 %v577, 1
          %v593 = vpop.permute.xlu0 %592
          %594 = vrot.lane.b32.xlu0 %v578, 1
          %v595 = vpop.permute.xlu0 %594
          %596 = vrot.lane.b32.xlu0 %v579, 1
          %v597 = vpop.permute.xlu0 %596
          %vm598 = vcmask 7168
          %v599 = vsel %vm598, %v587, %v589
          %v600 = vsel %vm598, %v591, %v593
          %v601 = vsel %vm598, %v595, %v597
          %s605 = smul.u32 %s309, 16
          %s606 = scalar_lea.vmem [#allocation3], %s605
          %vm607 = vcmask 130055
          %608 = vst.msk [vmem:[%s606 - $0x7] sm:$0x80] %vm607, %v599
          %609 = vst.msk [vmem:[%s606 + $0x1] sm:$0xff] %vm281, %v600
          %vm610 = vcmask 129024
          %611 = vst.msk [vmem:[%s606 + $0x9] sm:$0x7f] %vm610, %v601
        $region61: #{main_model_forward.1} parent=39 // loop_footer
          %s313 = sadd.s32 1, %s309
        $region62: #{main_model_forward.1} parent=39 // loop_footer_branch
          %308 = sbr.rel target = $region58
        $region63: #{main_model_forward.1} parent=39 // loop_exit
          _
        %612 = vst [vmem:[#allocation4] sm:$0xff] 0.0
        %613 = vst [vmem:[#allocation4 + $0x8] sm:$0xff] 0.0
        %614 = vst.msk [vmem:[#allocation4 + $0x10] sm:$0xff] %vm281, 0.0
        %615 = vst [vmem:[#allocation4 + $0x18] sm:$0xff] 0.0
        %616 = vst [vmem:[#allocation4 + $0x20] sm:$0xff] 0.0
        %617 = vst.msk [vmem:[#allocation4 + $0x28] sm:$0xff] %vm281, 0.0
        %618 = vst [vmem:[#allocation4 + $0x30] sm:$0xff] 0.0
        %619 = vst [vmem:[#allocation4 + $0x38] sm:$0xff] 0.0
        %620 = vst.msk [vmem:[#allocation4 + $0x40] sm:$0xff] %vm281, 0.0
        %621 = vst [vmem:[#allocation4 + $0x48] sm:$0xff] 0.0
        %622 = vst [vmem:[#allocation4 + $0x50] sm:$0xff] 0.0
        %623 = vst.msk [vmem:[#allocation4 + $0x58] sm:$0xff] %vm281, 0.0
        %s624 = sld [smem:[#allocation11]]
        %v625 = vstv %s624
        loop: start=0, step=1, limit=32
        $region64: #{main_model_forward.1} parent=39 // loop_pre_header
          _
        $region65: #{main_model_forward.1} parent=39 // loop_header
          %s627 = sphi 0, %s631
          %p628 = scmp.ge.s32.totalorder %s627, 32
          %v632 = vphi 0.0, %v642
          %v633 = vphi 0.0, %v643
        $region66: #{main_model_forward.1} parent=39 // loop_header_branch
          %630 = sbr.rel (%p628) target = $region70
        $region67: #{main_model_forward.1} parent=39 // loop_body
          %s634 = sld [smem:[#allocation10 + %s627]]
          %s635 = smul.u32 %s627, 16
          %s636 = scalar_lea.vmem [#allocation3], %s635
          %v637 = vld [vmem:[%s636] sm:$0xff]
          %v638 = vld [vmem:[%s636 + $0x8] sm:$0xff]
          %v639 = vstv %s634
          %v640 = vmul.f32 %v639, %v637
          %v641 = vmul.f32 %v639, %v638
          %v642 = vadd.f32 %v632, %v640
          %v643 = vadd.f32 %v633, %v641
        $region68: #{main_model_forward.1} parent=39 // loop_footer
          %s631 = sadd.s32 1, %s627
        $region69: #{main_model_forward.1} parent=39 // loop_footer_branch
          %626 = sbr.rel target = $region65
        $region70: #{main_model_forward.1} parent=39 // loop_exit
          _
        %644 = vst.msk [vmem:[#allocation4 + $0x20] sm:$0xff] %vm281, %v632
        %645 = vst.msk [vmem:[#allocation4 + $0x38] sm:$0xff] %vm281, %v633
        %v646 = vld [vmem:[#allocation4] sm:$0x80]
        %v647 = vld [vmem:[#allocation4 + $0x8] sm:$0x80]
        %v648 = vld [vmem:[#allocation4 + $0x18] sm:$0xff]
        %v649 = vld [vmem:[#allocation4 + $0x20] sm:$0xff]
        %v650 = vld [vmem:[#allocation4 + $0x30] sm:$0x7f]
        %v651 = vld [vmem:[#allocation4 + $0x38] sm:$0x7f]
        %v652 = vadd.f32 %v625, %v646
        %v653 = vadd.f32 %v625, %v647
        %v654 = vadd.f32 %v625, %v648
        %v655 = vadd.f32 %v625, %v649
        %v656 = vadd.f32 %v625, %v650
        %v657 = vadd.f32 %v625, %v651
        loop: start=0, step=1, limit=32
        $region71: #{main_model_forward.1} parent=39 // loop_pre_header
          _
        $region72: #{main_model_forward.1} parent=39 // loop_header
          %s659 = sphi 0, %s663
          %p660 = scmp.ge.s32.totalorder %s659, 32
          %v664 = vphi 0.0, %v681
          %v665 = vphi 0.0, %v682
        $region73: #{main_model_forward.1} parent=39 // loop_header_branch
          %662 = sbr.rel (%p660) target = $region77
        $region74: #{main_model_forward.1} parent=39 // loop_body
          %s666 = sshra.s32 %s659, 7
          %s667 = sand.u32 %s659, 127
          %s668 = sadd.s32 %s666, 1
          %s669 = smul.u32 %s668, 128
          %s670 = sshra.s32 %s659, 7
          %s671 = sand.u32 %s659, 127
          %s672 = sadd.s32 %s669, %s671
          %s673 = sld [smem:[#allocation10 + %s672]]
          %s674 = smul.u32 %s659, 16
          %s675 = scalar_lea.vmem [#allocation3], %s674
          %v676 = vld [vmem:[%s675] sm:$0xff]
          %v677 = vld [vmem:[%s675 + $0x8] sm:$0xff]
          %v678 = vstv %s673
          %v679 = vmul.f32 %v678, %v676
          %v680 = vmul.f32 %v678, %v677
          %v681 = vadd.f32 %v664, %v679
          %v682 = vadd.f32 %v665, %v680
        $region75: #{main_model_forward.1} parent=39 // loop_footer
          %s663 = sadd.s32 1, %s659
        $region76: #{main_model_forward.1} parent=39 // loop_footer_branch
          %658 = sbr.rel target = $region72
        $region77: #{main_model_forward.1} parent=39 // loop_exit
          _
        %683 = vst.msk [vmem:[#allocation4 + $0x20] sm:$0xff] %vm281, %v664
        %684 = vst.msk [vmem:[#allocation4 + $0x38] sm:$0xff] %vm281, %v665
        %v685 = vld [vmem:[#allocation4 + $0x8] sm:$0x80]
        %v686 = vld [vmem:[#allocation4 + $0x20] sm:$0xff]
        %v687 = vld [vmem:[#allocation4 + $0x38] sm:$0x7f]
        %691 = vrot.lane.b32.xlu0 %v685, 127
        %v692 = vpop.permute.xlu0 %691
        %693 = vrot.lane.b32.xlu0 %v686, 127
        %v694 = vpop.permute.xlu0 %693
        %695 = vrot.lane.b32.xlu0 %v687, 127
        %v696 = vpop.permute.xlu0 %695
        %v700 = vadd.f32 %v652, %v692
        %v701 = vadd.f32 %v653, %v692
        %v702 = vadd.f32 %v654, %v694
        %v703 = vadd.f32 %v655, %v694
        %v704 = vadd.f32 %v656, %v696
        %v705 = vadd.f32 %v657, %v696
        loop: start=0, step=1, limit=32
        $region78: #{main_model_forward.1} parent=39 // loop_pre_header
          _
        $region79: #{main_model_forward.1} parent=39 // loop_header
          %s707 = sphi 0, %s711
          %p708 = scmp.ge.s32.totalorder %s707, 32
          %v712 = vphi 0.0, %v729
          %v713 = vphi 0.0, %v730
        $region80: #{main_model_forward.1} parent=39 // loop_header_branch
          %710 = sbr.rel (%p708) target = $region84
        $region81: #{main_model_forward.1} parent=39 // loop_body
          %s714 = sshra.s32 %s707, 7
          %s715 = sand.u32 %s707, 127
          %s716 = sadd.s32 %s714, 2
          %s717 = smul.u32 %s716, 128
          %s718 = sshra.s32 %s707, 7
          %s719 = sand.u32 %s707, 127
          %s720 = sadd.s32 %s717, %s719
          %s721 = sld [smem:[#allocation10 + %s720]]
          %s722 = smul.u32 %s707, 16
          %s723 = scalar_lea.vmem [#allocation3], %s722
          %v724 = vld [vmem:[%s723] sm:$0xff]
          %v725 = vld [vmem:[%s723 + $0x8] sm:$0xff]
          %v726 = vstv %s721
          %v727 = vmul.f32 %v726, %v724
          %v728 = vmul.f32 %v726, %v725
          %v729 = vadd.f32 %v712, %v727
          %v730 = vadd.f32 %v713, %v728
        $region82: #{main_model_forward.1} parent=39 // loop_footer
          %s711 = sadd.s32 1, %s707
        $region83: #{main_model_forward.1} parent=39 // loop_footer_branch
          %706 = sbr.rel target = $region79
        $region84: #{main_model_forward.1} parent=39 // loop_exit
          _
        %731 = vst.msk [vmem:[#allocation4 + $0x20] sm:$0xff] %vm281, %v712
        %732 = vst.msk [vmem:[#allocation4 + $0x38] sm:$0xff] %vm281, %v713
        %v733 = vld [vmem:[#allocation4 + $0x8] sm:$0x80]
        %v734 = vld [vmem:[#allocation4 + $0x20] sm:$0xff]
        %v735 = vld [vmem:[#allocation4 + $0x38] sm:$0x7f]
        %739 = vrot.lane.b32.xlu0 %v733, 126
        %v740 = vpop.permute.xlu0 %739
        %741 = vrot.lane.b32.xlu0 %v734, 126
        %v742 = vpop.permute.xlu0 %741
        %743 = vrot.lane.b32.xlu0 %v735, 126
        %v744 = vpop.permute.xlu0 %743
        %v748 = vadd.f32 %v700, %v740
        %v749 = vadd.f32 %v701, %v740
        %v750 = vadd.f32 %v702, %v742
        %v751 = vadd.f32 %v703, %v742
        %v752 = vadd.f32 %v704, %v744
        %v753 = vadd.f32 %v705, %v744
        loop: start=0, step=1, limit=32
        $region85: #{main_model_forward.1} parent=39 // loop_pre_header
          _
        $region86: #{main_model_forward.1} parent=39 // loop_header
          %s755 = sphi 0, %s759
          %p756 = scmp.ge.s32.totalorder %s755, 32
          %v760 = vphi 0.0, %v777
          %v761 = vphi 0.0, %v778
        $region87: #{main_model_forward.1} parent=39 // loop_header_branch
          %758 = sbr.rel (%p756) target = $region91
        $region88: #{main_model_forward.1} parent=39 // loop_body
          %s762 = sshra.s32 %s755, 7
          %s763 = sand.u32 %s755, 127
          %s764 = sadd.s32 %s762, 3
          %s765 = smul.u32 %s764, 128
          %s766 = sshra.s32 %s755, 7
          %s767 = sand.u32 %s755, 127
          %s768 = sadd.s32 %s765, %s767
          %s769 = sld [smem:[#allocation10 + %s768]]
          %s770 = smul.u32 %s755, 16
          %s771 = scalar_lea.vmem [#allocation3], %s770
          %v772 = vld [vmem:[%s771] sm:$0xff]
          %v773 = vld [vmem:[%s771 + $0x8] sm:$0xff]
          %v774 = vstv %s769
          %v775 = vmul.f32 %v774, %v772
          %v776 = vmul.f32 %v774, %v773
          %v777 = vadd.f32 %v760, %v775
          %v778 = vadd.f32 %v761, %v776
        $region89: #{main_model_forward.1} parent=39 // loop_footer
          %s759 = sadd.s32 1, %s755
        $region90: #{main_model_forward.1} parent=39 // loop_footer_branch
          %754 = sbr.rel target = $region86
        $region91: #{main_model_forward.1} parent=39 // loop_exit
          _
        %779 = vst.msk [vmem:[#allocation4 + $0x20] sm:$0xff] %vm281, %v760
        %780 = vst.msk [vmem:[#allocation4 + $0x38] sm:$0xff] %vm281, %v761
        %v781 = vld [vmem:[#allocation4 + $0x18] sm:$0xff]
        %v782 = vld [vmem:[#allocation4 + $0x20] sm:$0xff]
        %v783 = vld [vmem:[#allocation4 + $0x30] sm:$0xff]
        %v784 = vld [vmem:[#allocation4 + $0x38] sm:$0xff]
        %vm789 = vcmask 1046528
        %v790 = vrot.slane %v781, 1
        %v791 = vrot.slane %v782, 1
        %v792 = vrot.slane %v783, 1
        %v793 = vsel %vm789, %v790, %v792
        %v794 = vrot.slane %v784, 1
        %v795 = vsel %vm789, %v791, %v794
        %v802 = vadd.f32 %v748, %v790
        %v803 = vadd.f32 %v749, %v791
        %v804 = vadd.f32 %v750, %v793
        %v805 = vadd.f32 %v751, %v795
        %v806 = vadd.f32 %v752, %v792
        %v807 = vadd.f32 %v753, %v794
        loop: start=0, step=1, limit=32
        $region92: #{main_model_forward.1} parent=39 // loop_pre_header
          _
        $region93: #{main_model_forward.1} parent=39 // loop_header
          %s809 = sphi 0, %s813
          %p810 = scmp.ge.s32.totalorder %s809, 32
          %v814 = vphi 0.0, %v831
          %v815 = vphi 0.0, %v832
        $region94: #{main_model_forward.1} parent=39 // loop_header_branch
          %812 = sbr.rel (%p810) target = $region98
        $region95: #{main_model_forward.1} parent=39 // loop_body
          %s816 = sshra.s32 %s809, 7
          %s817 = sand.u32 %s809, 127
          %s818 = sadd.s32 %s816, 4
          %s819 = smul.u32 %s818, 128
          %s820 = sshra.s32 %s809, 7
          %s821 = sand.u32 %s809, 127
          %s822 = sadd.s32 %s819, %s821
          %s823 = sld [smem:[#allocation10 + %s822]]
          %s824 = smul.u32 %s809, 16
          %s825 = scalar_lea.vmem [#allocation3], %s824
          %v826 = vld [vmem:[%s825] sm:$0xff]
          %v827 = vld [vmem:[%s825 + $0x8] sm:$0xff]
          %v828 = vstv %s823
          %v829 = vmul.f32 %v828, %v826
          %v830 = vmul.f32 %v828, %v827
          %v831 = vadd.f32 %v814, %v829
          %v832 = vadd.f32 %v815, %v830
        $region96: #{main_model_forward.1} parent=39 // loop_footer
          %s813 = sadd.s32 1, %s809
        $region97: #{main_model_forward.1} parent=39 // loop_footer_branch
          %808 = sbr.rel target = $region93
        $region98: #{main_model_forward.1} parent=39 // loop_exit
          _
        %833 = vst.msk [vmem:[#allocation4 + $0x20] sm:$0xff] %vm281, %v814
        %834 = vst.msk [vmem:[#allocation4 + $0x38] sm:$0xff] %vm281, %v815
        %v835 = vld [vmem:[#allocation4 + $0x20] sm:$0xff]
        %v836 = vld [vmem:[#allocation4 + $0x38] sm:$0xff]
        %v839 = vrot.slane %v835, 1
        %v840 = vrot.slane %v836, 1
        %v841 = vsel %vm789, %v839, %v840
        %842 = vrot.lane.b32.xlu0 %v839, 127
        %v843 = vpop.permute.xlu0 %842
        %844 = vrot.lane.b32.xlu0 %v841, 127
        %v845 = vpop.permute.xlu0 %844
        %846 = vrot.lane.b32.xlu0 %v840, 127
        %v847 = vpop.permute.xlu0 %846
        %v851 = vadd.f32 %v802, %v843
        %v852 = vadd.f32 %v803, %v843
        %v853 = vadd.f32 %v804, %v845
        %v854 = vadd.f32 %v805, %v845
        %v855 = vadd.f32 %v806, %v847
        %v856 = vadd.f32 %v807, %v847
        loop: start=0, step=1, limit=32
        $region99: #{main_model_forward.1} parent=39 // loop_pre_header
          _
        $region100: #{main_model_forward.1} parent=39 // loop_header
          %s858 = sphi 0, %s862
          %p859 = scmp.ge.s32.totalorder %s858, 32
          %v863 = vphi 0.0, %v880
          %v864 = vphi 0.0, %v881
        $region101: #{main_model_forward.1} parent=39 // loop_header_branch
          %861 = sbr.rel (%p859) target = $region105
        $region102: #{main_model_forward.1} parent=39 // loop_body
          %s865 = sshra.s32 %s858, 7
          %s866 = sand.u32 %s858, 127
          %s867 = sadd.s32 %s865, 5
          %s868 = smul.u32 %s867, 128
          %s869 = sshra.s32 %s858, 7
          %s870 = sand.u32 %s858, 127
          %s871 = sadd.s32 %s868, %s870
          %s872 = sld [smem:[#allocation10 + %s871]]
          %s873 = smul.u32 %s858, 16
          %s874 = scalar_lea.vmem [#allocation3], %s873
          %v875 = vld [vmem:[%s874] sm:$0xff]
          %v876 = vld [vmem:[%s874 + $0x8] sm:$0xff]
          %v877 = vstv %s872
          %v878 = vmul.f32 %v877, %v875
          %v879 = vmul.f32 %v877, %v876
          %v880 = vadd.f32 %v863, %v878
          %v881 = vadd.f32 %v864, %v879
        $region103: #{main_model_forward.1} parent=39 // loop_footer
          %s862 = sadd.s32 1, %s858
        $region104: #{main_model_forward.1} parent=39 // loop_footer_branch
          %857 = sbr.rel target = $region100
        $region105: #{main_model_forward.1} parent=39 // loop_exit
          _
        %882 = vst.msk [vmem:[#allocation4 + $0x20] sm:$0xff] %vm281, %v863
        %883 = vst.msk [vmem:[#allocation4 + $0x38] sm:$0xff] %vm281, %v864
        %v884 = vld [vmem:[#allocation4 + $0x20] sm:$0xff]
        %v885 = vld [vmem:[#allocation4 + $0x38] sm:$0xff]
        %v888 = vrot.slane %v884, 1
        %v889 = vrot.slane %v885, 1
        %v890 = vsel %vm789, %v888, %v889
        %891 = vrot.lane.b32.xlu0 %v888, 126
        %v892 = vpop.permute.xlu0 %891
        %893 = vrot.lane.b32.xlu0 %v890, 126
        %v894 = vpop.permute.xlu0 %893
        %895 = vrot.lane.b32.xlu0 %v889, 126
        %v896 = vpop.permute.xlu0 %895
        %v900 = vadd.f32 %v851, %v892
        %v901 = vadd.f32 %v852, %v892
        %v902 = vadd.f32 %v853, %v894
        %v903 = vadd.f32 %v854, %v894
        %v904 = vadd.f32 %v855, %v896
        %v905 = vadd.f32 %v856, %v896
        loop: start=0, step=1, limit=32
        $region106: #{main_model_forward.1} parent=39 // loop_pre_header
          _
        $region107: #{main_model_forward.1} parent=39 // loop_header
          %s907 = sphi 0, %s911
          %p908 = scmp.ge.s32.totalorder %s907, 32
          %v912 = vphi 0.0, %v929
          %v913 = vphi 0.0, %v930
        $region108: #{main_model_forward.1} parent=39 // loop_header_branch
          %910 = sbr.rel (%p908) target = $region112
        $region109: #{main_model_forward.1} parent=39 // loop_body
          %s914 = sshra.s32 %s907, 7
          %s915 = sand.u32 %s907, 127
          %s916 = sadd.s32 %s914, 6
          %s917 = smul.u32 %s916, 128
          %s918 = sshra.s32 %s907, 7
          %s919 = sand.u32 %s907, 127
          %s920 = sadd.s32 %s917, %s919
          %s921 = sld [smem:[#allocation10 + %s920]]
          %s922 = smul.u32 %s907, 16
          %s923 = scalar_lea.vmem [#allocation3], %s922
          %v924 = vld [vmem:[%s923] sm:$0xff]
          %v925 = vld [vmem:[%s923 + $0x8] sm:$0xff]
          %v926 = vstv %s921
          %v927 = vmul.f32 %v926, %v924
          %v928 = vmul.f32 %v926, %v925
          %v929 = vadd.f32 %v912, %v927
          %v930 = vadd.f32 %v913, %v928
        $region110: #{main_model_forward.1} parent=39 // loop_footer
          %s911 = sadd.s32 1, %s907
        $region111: #{main_model_forward.1} parent=39 // loop_footer_branch
          %906 = sbr.rel target = $region107
        $region112: #{main_model_forward.1} parent=39 // loop_exit
          _
        %931 = vst.msk [vmem:[#allocation4 + $0x20] sm:$0xff] %vm281, %v912
        %932 = vst.msk [vmem:[#allocation4 + $0x38] sm:$0xff] %vm281, %v913
        %v933 = vld [vmem:[#allocation4 + $0x18] sm:$0xfe]
        %v934 = vld [vmem:[#allocation4 + $0x20] sm:$0xfe]
        %v935 = vld [vmem:[#allocation4 + $0x30] sm:$0xff]
        %v936 = vld [vmem:[#allocation4 + $0x38] sm:$0xff]
        %v937 = vld [vmem:[#allocation4 + $0x48] sm:$0x1]
        %v938 = vld [vmem:[#allocation4 + $0x50] sm:$0x1]
        %vm945 = vcmask 1045504
        %v946 = vrot.slane %v933, 2
        %v947 = vrot.slane %v934, 2
        %v948 = vrot.slane %v935, 2
        %v949 = vsel %vm945, %v946, %v948
        %v950 = vrot.slane %v936, 2
        %v951 = vsel %vm945, %v947, %v950
        %v952 = vrot.slane %v937, 2
        %v953 = vsel %vm945, %v948, %v952
        %v954 = vrot.slane %v938, 2
        %v955 = vsel %vm945, %v950, %v954
        %v962 = vadd.f32 %v900, %v946
        %v963 = vadd.f32 %v901, %v947
        %v964 = vadd.f32 %v902, %v949
        %v965 = vadd.f32 %v903, %v951
        %v966 = vadd.f32 %v904, %v953
        %v967 = vadd.f32 %v905, %v955
        loop: start=0, step=1, limit=32
        $region113: #{main_model_forward.1} parent=39 // loop_pre_header
          _
        $region114: #{main_model_forward.1} parent=39 // loop_header
          %s969 = sphi 0, %s973
          %p970 = scmp.ge.s32.totalorder %s969, 32
          %v974 = vphi 0.0, %v991
          %v975 = vphi 0.0, %v992
        $region115: #{main_model_forward.1} parent=39 // loop_header_branch
          %972 = sbr.rel (%p970) target = $region119
        $region116: #{main_model_forward.1} parent=39 // loop_body
          %s976 = sshra.s32 %s969, 7
          %s977 = sand.u32 %s969, 127
          %s978 = sadd.s32 %s976, 7
          %s979 = smul.u32 %s978, 128
          %s980 = sshra.s32 %s969, 7
          %s981 = sand.u32 %s969, 127
          %s982 = sadd.s32 %s979, %s981
          %s983 = sld [smem:[#allocation10 + %s982]]
          %s984 = smul.u32 %s969, 16
          %s985 = scalar_lea.vmem [#allocation3], %s984
          %v986 = vld [vmem:[%s985] sm:$0xff]
          %v987 = vld [vmem:[%s985 + $0x8] sm:$0xff]
          %v988 = vstv %s983
          %v989 = vmul.f32 %v988, %v986
          %v990 = vmul.f32 %v988, %v987
          %v991 = vadd.f32 %v974, %v989
          %v992 = vadd.f32 %v975, %v990
        $region117: #{main_model_forward.1} parent=39 // loop_footer
          %s973 = sadd.s32 1, %s969
        $region118: #{main_model_forward.1} parent=39 // loop_footer_branch
          %968 = sbr.rel target = $region114
        $region119: #{main_model_forward.1} parent=39 // loop_exit
          _
        %993 = vst.msk [vmem:[#allocation4 + $0x20] sm:$0xff] %vm281, %v974
        %994 = vst.msk [vmem:[#allocation4 + $0x38] sm:$0xff] %vm281, %v975
        %v995 = vld [vmem:[#allocation4 + $0x20] sm:$0xfe]
        %v996 = vld [vmem:[#allocation4 + $0x38] sm:$0xff]
        %v997 = vld [vmem:[#allocation4 + $0x50] sm:$0x1]
        %v1001 = vrot.slane %v995, 2
        %v1002 = vrot.slane %v996, 2
        %v1003 = vsel %vm945, %v1001, %v1002
        %v1004 = vrot.slane %v997, 2
        %v1005 = vsel %vm945, %v1002, %v1004
        %1006 = vrot.lane.b32.xlu0 %v1001, 127
        %v1007 = vpop.permute.xlu0 %1006
        %1008 = vrot.lane.b32.xlu0 %v1003, 127
        %v1009 = vpop.permute.xlu0 %1008
        %1010 = vrot.lane.b32.xlu0 %v1005, 127
        %v1011 = vpop.permute.xlu0 %1010
        %v1015 = vadd.f32 %v962, %v1007
        %v1016 = vadd.f32 %v963, %v1007
        %v1017 = vadd.f32 %v964, %v1009
        %v1018 = vadd.f32 %v965, %v1009
        %v1019 = vadd.f32 %v966, %v1011
        %v1020 = vadd.f32 %v967, %v1011
        loop: start=0, step=1, limit=32
        $region120: #{main_model_forward.1} parent=39 // loop_pre_header
          _
        $region121: #{main_model_forward.1} parent=39 // loop_header
          %s1022 = sphi 0, %s1026
          %p1023 = scmp.ge.s32.totalorder %s1022, 32
          %v1027 = vphi 0.0, %v1044
          %v1028 = vphi 0.0, %v1045
        $region122: #{main_model_forward.1} parent=39 // loop_header_branch
          %1025 = sbr.rel (%p1023) target = $region126
        $region123: #{main_model_forward.1} parent=39 // loop_body
          %s1029 = sshra.s32 %s1022, 7
          %s1030 = sand.u32 %s1022, 127
          %s1031 = sadd.s32 %s1029, 8
          %s1032 = smul.u32 %s1031, 128
          %s1033 = sshra.s32 %s1022, 7
          %s1034 = sand.u32 %s1022, 127
          %s1035 = sadd.s32 %s1032, %s1034
          %s1036 = sld [smem:[#allocation10 + %s1035]]
          %s1037 = smul.u32 %s1022, 16
          %s1038 = scalar_lea.vmem [#allocation3], %s1037
          %v1039 = vld [vmem:[%s1038] sm:$0xff]
          %v1040 = vld [vmem:[%s1038 + $0x8] sm:$0xff]
          %v1041 = vstv %s1036
          %v1042 = vmul.f32 %v1041, %v1039
          %v1043 = vmul.f32 %v1041, %v1040
          %v1044 = vadd.f32 %v1027, %v1042
          %v1045 = vadd.f32 %v1028, %v1043
        $region124: #{main_model_forward.1} parent=39 // loop_footer
          %s1026 = sadd.s32 1, %s1022
        $region125: #{main_model_forward.1} parent=39 // loop_footer_branch
          %1021 = sbr.rel target = $region121
        $region126: #{main_model_forward.1} parent=39 // loop_exit
          _
        %1046 = vst.msk [vmem:[#allocation4 + $0x20] sm:$0xff] %vm281, %v1027
        %1047 = vst.msk [vmem:[#allocation4 + $0x38] sm:$0xff] %vm281, %v1028
        %v1048 = vld [vmem:[#allocation4 + $0x20] sm:$0xfe]
        %v1049 = vld [vmem:[#allocation4 + $0x38] sm:$0xff]
        %v1050 = vld [vmem:[#allocation4 + $0x50] sm:$0x1]
        %v1054 = vrot.slane %v1048, 2
        %v1055 = vrot.slane %v1049, 2
        %v1056 = vsel %vm945, %v1054, %v1055
        %v1057 = vrot.slane %v1050, 2
        %v1058 = vsel %vm945, %v1055, %v1057
        %1059 = vrot.lane.b32.xlu0 %v1054, 126
        %v1060 = vpop.permute.xlu0 %1059
        %1061 = vrot.lane.b32.xlu0 %v1056, 126
        %v1062 = vpop.permute.xlu0 %1061
        %1063 = vrot.lane.b32.xlu0 %v1058, 126
        %v1064 = vpop.permute.xlu0 %1063
        %v1068 = vadd.f32 %v1015, %v1060
        %v1069 = vadd.f32 %v1016, %v1060
        %v1070 = vadd.f32 %v1017, %v1062
        %v1071 = vadd.f32 %v1018, %v1062
        %v1072 = vadd.f32 %v1019, %v1064
        %v1073 = vadd.f32 %v1020, %v1064
        %v1074 = vtanh.pop %v1068
        %v1075 = vtanh.pop %v1069
        %v1076 = vtanh.pop %v1070
        %v1077 = vtanh.pop %v1071
        %v1078 = vtanh.pop %v1072
        %v1079 = vtanh.pop %v1073
        %1086 = vrot.lane.b32.xlu0 %v1074, 1
        %v1087 = vpop.permute.xlu0 %1086
        %1088 = vrot.lane.b32.xlu0 %v1075, 1
        %v1089 = vpop.permute.xlu0 %1088
        %1090 = vrot.lane.b32.xlu0 %v1076, 1
        %v1091 = vpop.permute.xlu0 %1090
        %1092 = vrot.lane.b32.xlu0 %v1077, 1
        %v1093 = vpop.permute.xlu0 %1092
        %1094 = vrot.lane.b32.xlu0 %v1078, 1
        %v1095 = vpop.permute.xlu0 %1094
        %1096 = vrot.lane.b32.xlu0 %v1079, 1
        %v1097 = vpop.permute.xlu0 %1096
        %vm1098 = vcmask 7168
        %v1099 = vsel %vm1098, %v1087, %v1089
        %v1100 = vsel %vm1098, %v1091, %v1093
        %v1101 = vsel %vm1098, %v1095, %v1097
        %vm1105 = vcmask 130055
        %1106 = vst.msk [vmem:[%s273 - $0x7] sm:$0x80] %vm1105, %v1099
        %1107 = vst.msk [vmem:[%s273 + $0x1] sm:$0xff] %vm281, %v1100
        %vm1108 = vcmask 129024
        %1109 = vst.msk [vmem:[%s273 + $0x9] sm:$0x7f] %vm1108, %v1101
        %s1110 = sld [smem:[#allocation11 + $0x1]]
        %v1111 = vstv %s1110
        loop: start=0, step=1, limit=32
        $region127: #{main_model_forward.1} parent=39 // loop_pre_header
          _
        $region128: #{main_model_forward.1} parent=39 // loop_header
          %s1113 = sphi 0, %s1117
          %p1114 = scmp.ge.s32.totalorder %s1113, 32
          %v1118 = vphi 0.0, %v1129
          %v1119 = vphi 0.0, %v1130
        $region129: #{main_model_forward.1} parent=39 // loop_header_branch
          %1116 = sbr.rel (%p1114) target = $region133
        $region130: #{main_model_forward.1} parent=39 // loop_body
          %s1120 = sadd.s32 %s1113, 32
          %s1121 = sld [smem:[#allocation10 + %s1120]]
          %s1122 = smul.u32 %s1113, 16
          %s1123 = scalar_lea.vmem [#allocation3], %s1122
          %v1124 = vld [vmem:[%s1123] sm:$0xff]
          %v1125 = vld [vmem:[%s1123 + $0x8] sm:$0xff]
          %v1126 = vstv %s1121
          %v1127 = vmul.f32 %v1126, %v1124
          %v1128 = vmul.f32 %v1126, %v1125
          %v1129 = vadd.f32 %v1118, %v1127
          %v1130 = vadd.f32 %v1119, %v1128
        $region131: #{main_model_forward.1} parent=39 // loop_footer
          %s1117 = sadd.s32 1, %s1113
        $region132: #{main_model_forward.1} parent=39 // loop_footer_branch
          %1112 = sbr.rel target = $region128
        $region133: #{main_model_forward.1} parent=39 // loop_exit
          _
        %1131 = vst.msk [vmem:[#allocation4 + $0x20] sm:$0xff] %vm281, %v1118
        %1132 = vst.msk [vmem:[#allocation4 + $0x38] sm:$0xff] %vm281, %v1119
        %v1133 = vld [vmem:[#allocation4] sm:$0x80]
        %v1134 = vld [vmem:[#allocation4 + $0x8] sm:$0x80]
        %v1135 = vld [vmem:[#allocation4 + $0x18] sm:$0xff]
        %v1136 = vld [vmem:[#allocation4 + $0x20] sm:$0xff]
        %v1137 = vld [vmem:[#allocation4 + $0x30] sm:$0x7f]
        %v1138 = vld [vmem:[#allocation4 + $0x38] sm:$0x7f]
        %v1139 = vadd.f32 %v1111, %v1133
        %v1140 = vadd.f32 %v1111, %v1134
        %v1141 = vadd.f32 %v1111, %v1135
        %v1142 = vadd.f32 %v1111, %v1136
        %v1143 = vadd.f32 %v1111, %v1137
        %v1144 = vadd.f32 %v1111, %v1138
        loop: start=0, step=1, limit=32
        $region134: #{main_model_forward.1} parent=39 // loop_pre_header
          _
        $region135: #{main_model_forward.1} parent=39 // loop_header
          %s1146 = sphi 0, %s1150
          %p1147 = scmp.ge.s32.totalorder %s1146, 32
          %v1151 = vphi 0.0, %v1169
          %v1152 = vphi 0.0, %v1170
        $region136: #{main_model_forward.1} parent=39 // loop_header_branch
          %1149 = sbr.rel (%p1147) target = $region140
        $region137: #{main_model_forward.1} parent=39 // loop_body
          %s1153 = sadd.s32 %s1146, 32
          %s1154 = sshra.s32 %s1153, 7
          %s1155 = sand.u32 %s1153, 127
          %s1156 = sadd.s32 %s1154, 1
          %s1157 = smul.u32 %s1156, 128
          %s1158 = sshra.s32 %s1153, 7
          %s1159 = sand.u32 %s1153, 127
          %s1160 = sadd.s32 %s1157, %s1159
          %s1161 = sld [smem:[#allocation10 + %s1160]]
          %s1162 = smul.u32 %s1146, 16
          %s1163 = scalar_lea.vmem [#allocation3], %s1162
          %v1164 = vld [vmem:[%s1163] sm:$0xff]
          %v1165 = vld [vmem:[%s1163 + $0x8] sm:$0xff]
          %v1166 = vstv %s1161
          %v1167 = vmul.f32 %v1166, %v1164
          %v1168 = vmul.f32 %v1166, %v1165
          %v1169 = vadd.f32 %v1151, %v1167
          %v1170 = vadd.f32 %v1152, %v1168
        $region138: #{main_model_forward.1} parent=39 // loop_footer
          %s1150 = sadd.s32 1, %s1146
        $region139: #{main_model_forward.1} parent=39 // loop_footer_branch
          %1145 = sbr.rel target = $region135
        $region140: #{main_model_forward.1} parent=39 // loop_exit
          _
        %1171 = vst.msk [vmem:[#allocation4 + $0x20] sm:$0xff] %vm281, %v1151
        %1172 = vst.msk [vmem:[#allocation4 + $0x38] sm:$0xff] %vm281, %v1152
        %v1173 = vld [vmem:[#allocation4 + $0x8] sm:$0x80]
        %v1174 = vld [vmem:[#allocation4 + $0x20] sm:$0xff]
        %v1175 = vld [vmem:[#allocation4 + $0x38] sm:$0x7f]
        %1179 = vrot.lane.b32.xlu0 %v1173, 127
        %v1180 = vpop.permute.xlu0 %1179
        %1181 = vrot.lane.b32.xlu0 %v1174, 127
        %v1182 = vpop.permute.xlu0 %1181
        %1183 = vrot.lane.b32.xlu0 %v1175, 127
        %v1184 = vpop.permute.xlu0 %1183
        %v1188 = vadd.f32 %v1139, %v1180
        %v1189 = vadd.f32 %v1140, %v1180
        %v1190 = vadd.f32 %v1141, %v1182
        %v1191 = vadd.f32 %v1142, %v1182
        %v1192 = vadd.f32 %v1143, %v1184
        %v1193 = vadd.f32 %v1144, %v1184
        loop: start=0, step=1, limit=32
        $region141: #{main_model_forward.1} parent=39 // loop_pre_header
          _
        $region142: #{main_model_forward.1} parent=39 // loop_header
          %s1195 = sphi 0, %s1199
          %p1196 = scmp.ge.s32.totalorder %s1195, 32
          %v1200 = vphi 0.0, %v1218
          %v1201 = vphi 0.0, %v1219
        $region143: #{main_model_forward.1} parent=39 // loop_header_branch
          %1198 = sbr.rel (%p1196) target = $region147
        $region144: #{main_model_forward.1} parent=39 // loop_body
          %s1202 = sadd.s32 %s1195, 32
          %s1203 = sshra.s32 %s1202, 7
          %s1204 = sand.u32 %s1202, 127
          %s1205 = sadd.s32 %s1203, 2
          %s1206 = smul.u32 %s1205, 128
          %s1207 = sshra.s32 %s1202, 7
          %s1208 = sand.u32 %s1202, 127
          %s1209 = sadd.s32 %s1206, %s1208
          %s1210 = sld [smem:[#allocation10 + %s1209]]
          %s1211 = smul.u32 %s1195, 16
          %s1212 = scalar_lea.vmem [#allocation3], %s1211
          %v1213 = vld [vmem:[%s1212] sm:$0xff]
          %v1214 = vld [vmem:[%s1212 + $0x8] sm:$0xff]
          %v1215 = vstv %s1210
          %v1216 = vmul.f32 %v1215, %v1213
          %v1217 = vmul.f32 %v1215, %v1214
          %v1218 = vadd.f32 %v1200, %v1216
          %v1219 = vadd.f32 %v1201, %v1217
        $region145: #{main_model_forward.1} parent=39 // loop_footer
          %s1199 = sadd.s32 1, %s1195
        $region146: #{main_model_forward.1} parent=39 // loop_footer_branch
          %1194 = sbr.rel target = $region142
        $region147: #{main_model_forward.1} parent=39 // loop_exit
          _
        %1220 = vst.msk [vmem:[#allocation4 + $0x20] sm:$0xff] %vm281, %v1200
        %1221 = vst.msk [vmem:[#allocation4 + $0x38] sm:$0xff] %vm281, %v1201
        %v1222 = vld [vmem:[#allocation4 + $0x8] sm:$0x80]
        %v1223 = vld [vmem:[#allocation4 + $0x20] sm:$0xff]
        %v1224 = vld [vmem:[#allocation4 + $0x38] sm:$0x7f]
        %1228 = vrot.lane.b32.xlu0 %v1222, 126
        %v1229 = vpop.permute.xlu0 %1228
        %1230 = vrot.lane.b32.xlu0 %v1223, 126
        %v1231 = vpop.permute.xlu0 %1230
        %1232 = vrot.lane.b32.xlu0 %v1224, 126
        %v1233 = vpop.permute.xlu0 %1232
        %v1237 = vadd.f32 %v1188, %v1229
        %v1238 = vadd.f32 %v1189, %v1229
        %v1239 = vadd.f32 %v1190, %v1231
        %v1240 = vadd.f32 %v1191, %v1231
        %v1241 = vadd.f32 %v1192, %v1233
        %v1242 = vadd.f32 %v1193, %v1233
        loop: start=0, step=1, limit=32
        $region148: #{main_model_forward.1} parent=39 // loop_pre_header
          _
        $region149: #{main_model_forward.1} parent=39 // loop_header
          %s1244 = sphi 0, %s1248
          %p1245 = scmp.ge.s32.totalorder %s1244, 32
          %v1249 = vphi 0.0, %v1267
          %v1250 = vphi 0.0, %v1268
        $region150: #{main_model_forward.1} parent=39 // loop_header_branch
          %1247 = sbr.rel (%p1245) target = $region154
        $region151: #{main_model_forward.1} parent=39 // loop_body
          %s1251 = sadd.s32 %s1244, 32
          %s1252 = sshra.s32 %s1251, 7
          %s1253 = sand.u32 %s1251, 127
          %s1254 = sadd.s32 %s1252, 3
          %s1255 = smul.u32 %s1254, 128
          %s1256 = sshra.s32 %s1251, 7
          %s1257 = sand.u32 %s1251, 127
          %s1258 = sadd.s32 %s1255, %s1257
          %s1259 = sld [smem:[#allocation10 + %s1258]]
          %s1260 = smul.u32 %s1244, 16
          %s1261 = scalar_lea.vmem [#allocation3], %s1260
          %v1262 = vld [vmem:[%s1261] sm:$0xff]
          %v1263 = vld [vmem:[%s1261 + $0x8] sm:$0xff]
          %v1264 = vstv %s1259
          %v1265 = vmul.f32 %v1264, %v1262
          %v1266 = vmul.f32 %v1264, %v1263
          %v1267 = vadd.f32 %v1249, %v1265
          %v1268 = vadd.f32 %v1250, %v1266
        $region152: #{main_model_forward.1} parent=39 // loop_footer
          %s1248 = sadd.s32 1, %s1244
        $region153: #{main_model_forward.1} parent=39 // loop_footer_branch
          %1243 = sbr.rel target = $region149
        $region154: #{main_model_forward.1} parent=39 // loop_exit
          _
        %1269 = vst.msk [vmem:[#allocation4 + $0x20] sm:$0xff] %vm281, %v1249
        %1270 = vst.msk [vmem:[#allocation4 + $0x38] sm:$0xff] %vm281, %v1250
        %v1271 = vld [vmem:[#allocation4 + $0x18] sm:$0xff]
        %v1272 = vld [vmem:[#allocation4 + $0x20] sm:$0xff]
        %v1273 = vld [vmem:[#allocation4 + $0x30] sm:$0xff]
        %v1274 = vld [vmem:[#allocation4 + $0x38] sm:$0xff]
        %v1279 = vrot.slane %v1271, 1
        %v1280 = vrot.slane %v1272, 1
        %v1281 = vrot.slane %v1273, 1
        %v1282 = vsel %vm789, %v1279, %v1281
        %v1283 = vrot.slane %v1274, 1
        %v1284 = vsel %vm789, %v1280, %v1283
        %v1291 = vadd.f32 %v1237, %v1279
        %v1292 = vadd.f32 %v1238, %v1280
        %v1293 = vadd.f32 %v1239, %v1282
        %v1294 = vadd.f32 %v1240, %v1284
        %v1295 = vadd.f32 %v1241, %v1281
        %v1296 = vadd.f32 %v1242, %v1283
        loop: start=0, step=1, limit=32
        $region155: #{main_model_forward.1} parent=39 // loop_pre_header
          _
        $region156: #{main_model_forward.1} parent=39 // loop_header
          %s1298 = sphi 0, %s1302
          %p1299 = scmp.ge.s32.totalorder %s1298, 32
          %v1303 = vphi 0.0, %v1321
          %v1304 = vphi 0.0, %v1322
        $region157: #{main_model_forward.1} parent=39 // loop_header_branch
          %1301 = sbr.rel (%p1299) target = $region161
        $region158: #{main_model_forward.1} parent=39 // loop_body
          %s1305 = sadd.s32 %s1298, 32
          %s1306 = sshra.s32 %s1305, 7
          %s1307 = sand.u32 %s1305, 127
          %s1308 = sadd.s32 %s1306, 4
          %s1309 = smul.u32 %s1308, 128
          %s1310 = sshra.s32 %s1305, 7
          %s1311 = sand.u32 %s1305, 127
          %s1312 = sadd.s32 %s1309, %s1311
          %s1313 = sld [smem:[#allocation10 + %s1312]]
          %s1314 = smul.u32 %s1298, 16
          %s1315 = scalar_lea.vmem [#allocation3], %s1314
          %v1316 = vld [vmem:[%s1315] sm:$0xff]
          %v1317 = vld [vmem:[%s1315 + $0x8] sm:$0xff]
          %v1318 = vstv %s1313
          %v1319 = vmul.f32 %v1318, %v1316
          %v1320 = vmul.f32 %v1318, %v1317
          %v1321 = vadd.f32 %v1303, %v1319
          %v1322 = vadd.f32 %v1304, %v1320
        $region159: #{main_model_forward.1} parent=39 // loop_footer
          %s1302 = sadd.s32 1, %s1298
        $region160: #{main_model_forward.1} parent=39 // loop_footer_branch
          %1297 = sbr.rel target = $region156
        $region161: #{main_model_forward.1} parent=39 // loop_exit
          _
        %1323 = vst.msk [vmem:[#allocation4 + $0x20] sm:$0xff] %vm281, %v1303
        %1324 = vst.msk [vmem:[#allocation4 + $0x38] sm:$0xff] %vm281, %v1304
        %v1325 = vld [vmem:[#allocation4 + $0x20] sm:$0xff]
        %v1326 = vld [vmem:[#allocation4 + $0x38] sm:$0xff]
        %v1329 = vrot.slane %v1325, 1
        %v1330 = vrot.slane %v1326, 1
        %v1331 = vsel %vm789, %v1329, %v1330
        %1332 = vrot.lane.b32.xlu0 %v1329, 127
        %v1333 = vpop.permute.xlu0 %1332
        %1334 = vrot.lane.b32.xlu0 %v1331, 127
        %v1335 = vpop.permute.xlu0 %1334
        %1336 = vrot.lane.b32.xlu0 %v1330, 127
        %v1337 = vpop.permute.xlu0 %1336
        %v1341 = vadd.f32 %v1291, %v1333
        %v1342 = vadd.f32 %v1292, %v1333
        %v1343 = vadd.f32 %v1293, %v1335
        %v1344 = vadd.f32 %v1294, %v1335
        %v1345 = vadd.f32 %v1295, %v1337
        %v1346 = vadd.f32 %v1296, %v1337
        loop: start=0, step=1, limit=32
        $region162: #{main_model_forward.1} parent=39 // loop_pre_header
          _
        $region163: #{main_model_forward.1} parent=39 // loop_header
          %s1348 = sphi 0, %s1352
          %p1349 = scmp.ge.s32.totalorder %s1348, 32
          %v1353 = vphi 0.0, %v1371
          %v1354 = vphi 0.0, %v1372
        $region164: #{main_model_forward.1} parent=39 // loop_header_branch
          %1351 = sbr.rel (%p1349) target = $region168
        $region165: #{main_model_forward.1} parent=39 // loop_body
          %s1355 = sadd.s32 %s1348, 32
          %s1356 = sshra.s32 %s1355, 7
          %s1357 = sand.u32 %s1355, 127
          %s1358 = sadd.s32 %s1356, 5
          %s1359 = smul.u32 %s1358, 128
          %s1360 = sshra.s32 %s1355, 7
          %s1361 = sand.u32 %s1355, 127
          %s1362 = sadd.s32 %s1359, %s1361
          %s1363 = sld [smem:[#allocation10 + %s1362]]
          %s1364 = smul.u32 %s1348, 16
          %s1365 = scalar_lea.vmem [#allocation3], %s1364
          %v1366 = vld [vmem:[%s1365] sm:$0xff]
          %v1367 = vld [vmem:[%s1365 + $0x8] sm:$0xff]
          %v1368 = vstv %s1363
          %v1369 = vmul.f32 %v1368, %v1366
          %v1370 = vmul.f32 %v1368, %v1367
          %v1371 = vadd.f32 %v1353, %v1369
          %v1372 = vadd.f32 %v1354, %v1370
        $region166: #{main_model_forward.1} parent=39 // loop_footer
          %s1352 = sadd.s32 1, %s1348
        $region167: #{main_model_forward.1} parent=39 // loop_footer_branch
          %1347 = sbr.rel target = $region163
        $region168: #{main_model_forward.1} parent=39 // loop_exit
          _
        %1373 = vst.msk [vmem:[#allocation4 + $0x20] sm:$0xff] %vm281, %v1353
        %1374 = vst.msk [vmem:[#allocation4 + $0x38] sm:$0xff] %vm281, %v1354
        %v1375 = vld [vmem:[#allocation4 + $0x20] sm:$0xff]
        %v1376 = vld [vmem:[#allocation4 + $0x38] sm:$0xff]
        %v1379 = vrot.slane %v1375, 1
        %v1380 = vrot.slane %v1376, 1
        %v1381 = vsel %vm789, %v1379, %v1380
        %1382 = vrot.lane.b32.xlu0 %v1379, 126
        %v1383 = vpop.permute.xlu0 %1382
        %1384 = vrot.lane.b32.xlu0 %v1381, 126
        %v1385 = vpop.permute.xlu0 %1384
        %1386 = vrot.lane.b32.xlu0 %v1380, 126
        %v1387 = vpop.permute.xlu0 %1386
        %v1391 = vadd.f32 %v1341, %v1383
        %v1392 = vadd.f32 %v1342, %v1383
        %v1393 = vadd.f32 %v1343, %v1385
        %v1394 = vadd.f32 %v1344, %v1385
        %v1395 = vadd.f32 %v1345, %v1387
        %v1396 = vadd.f32 %v1346, %v1387
        loop: start=0, step=1, limit=32
        $region169: #{main_model_forward.1} parent=39 // loop_pre_header
          _
        $region170: #{main_model_forward.1} parent=39 // loop_header
          %s1398 = sphi 0, %s1402
          %p1399 = scmp.ge.s32.totalorder %s1398, 32
          %v1403 = vphi 0.0, %v1421
          %v1404 = vphi 0.0, %v1422
        $region171: #{main_model_forward.1} parent=39 // loop_header_branch
          %1401 = sbr.rel (%p1399) target = $region175
        $region172: #{main_model_forward.1} parent=39 // loop_body
          %s1405 = sadd.s32 %s1398, 32
          %s1406 = sshra.s32 %s1405, 7
          %s1407 = sand.u32 %s1405, 127
          %s1408 = sadd.s32 %s1406, 6
          %s1409 = smul.u32 %s1408, 128
          %s1410 = sshra.s32 %s1405, 7
          %s1411 = sand.u32 %s1405, 127
          %s1412 = sadd.s32 %s1409, %s1411
          %s1413 = sld [smem:[#allocation10 + %s1412]]
          %s1414 = smul.u32 %s1398, 16
          %s1415 = scalar_lea.vmem [#allocation3], %s1414
          %v1416 = vld [vmem:[%s1415] sm:$0xff]
          %v1417 = vld [vmem:[%s1415 + $0x8] sm:$0xff]
          %v1418 = vstv %s1413
          %v1419 = vmul.f32 %v1418, %v1416
          %v1420 = vmul.f32 %v1418, %v1417
          %v1421 = vadd.f32 %v1403, %v1419
          %v1422 = vadd.f32 %v1404, %v1420
        $region173: #{main_model_forward.1} parent=39 // loop_footer
          %s1402 = sadd.s32 1, %s1398
        $region174: #{main_model_forward.1} parent=39 // loop_footer_branch
          %1397 = sbr.rel target = $region170
        $region175: #{main_model_forward.1} parent=39 // loop_exit
          _
        %1423 = vst.msk [vmem:[#allocation4 + $0x20] sm:$0xff] %vm281, %v1403
        %1424 = vst.msk [vmem:[#allocation4 + $0x38] sm:$0xff] %vm281, %v1404
        %v1425 = vld [vmem:[#allocation4 + $0x18] sm:$0xfe]
        %v1426 = vld [vmem:[#allocation4 + $0x20] sm:$0xfe]
        %v1427 = vld [vmem:[#allocation4 + $0x30] sm:$0xff]
        %v1428 = vld [vmem:[#allocation4 + $0x38] sm:$0xff]
        %v1429 = vld [vmem:[#allocation4 + $0x48] sm:$0x1]
        %v1430 = vld [vmem:[#allocation4 + $0x50] sm:$0x1]
        %v1437 = vrot.slane %v1425, 2
        %v1438 = vrot.slane %v1426, 2
        %v1439 = vrot.slane %v1427, 2
        %v1440 = vsel %vm945, %v1437, %v1439
        %v1441 = vrot.slane %v1428, 2
        %v1442 = vsel %vm945, %v1438, %v1441
        %v1443 = vrot.slane %v1429, 2
        %v1444 = vsel %vm945, %v1439, %v1443
        %v1445 = vrot.slane %v1430, 2
        %v1446 = vsel %vm945, %v1441, %v1445
        %v1453 = vadd.f32 %v1391, %v1437
        %v1454 = vadd.f32 %v1392, %v1438
        %v1455 = vadd.f32 %v1393, %v1440
        %v1456 = vadd.f32 %v1394, %v1442
        %v1457 = vadd.f32 %v1395, %v1444
        %v1458 = vadd.f32 %v1396, %v1446
        loop: start=0, step=1, limit=32
        $region176: #{main_model_forward.1} parent=39 // loop_pre_header
          _
        $region177: #{main_model_forward.1} parent=39 // loop_header
          %s1460 = sphi 0, %s1464
          %p1461 = scmp.ge.s32.totalorder %s1460, 32
          %v1465 = vphi 0.0, %v1483
          %v1466 = vphi 0.0, %v1484
        $region178: #{main_model_forward.1} parent=39 // loop_header_branch
          %1463 = sbr.rel (%p1461) target = $region182
        $region179: #{main_model_forward.1} parent=39 // loop_body
          %s1467 = sadd.s32 %s1460, 32
          %s1468 = sshra.s32 %s1467, 7
          %s1469 = sand.u32 %s1467, 127
          %s1470 = sadd.s32 %s1468, 7
          %s1471 = smul.u32 %s1470, 128
          %s1472 = sshra.s32 %s1467, 7
          %s1473 = sand.u32 %s1467, 127
          %s1474 = sadd.s32 %s1471, %s1473
          %s1475 = sld [smem:[#allocation10 + %s1474]]
          %s1476 = smul.u32 %s1460, 16
          %s1477 = scalar_lea.vmem [#allocation3], %s1476
          %v1478 = vld [vmem:[%s1477] sm:$0xff]
          %v1479 = vld [vmem:[%s1477 + $0x8] sm:$0xff]
          %v1480 = vstv %s1475
          %v1481 = vmul.f32 %v1480, %v1478
          %v1482 = vmul.f32 %v1480, %v1479
          %v1483 = vadd.f32 %v1465, %v1481
          %v1484 = vadd.f32 %v1466, %v1482
        $region180: #{main_model_forward.1} parent=39 // loop_footer
          %s1464 = sadd.s32 1, %s1460
        $region181: #{main_model_forward.1} parent=39 // loop_footer_branch
          %1459 = sbr.rel target = $region177
        $region182: #{main_model_forward.1} parent=39 // loop_exit
          _
        %1485 = vst.msk [vmem:[#allocation4 + $0x20] sm:$0xff] %vm281, %v1465
        %1486 = vst.msk [vmem:[#allocation4 + $0x38] sm:$0xff] %vm281, %v1466
        %v1487 = vld [vmem:[#allocation4 + $0x20] sm:$0xfe]
        %v1488 = vld [vmem:[#allocation4 + $0x38] sm:$0xff]
        %v1489 = vld [vmem:[#allocation4 + $0x50] sm:$0x1]
        %v1493 = vrot.slane %v1487, 2
        %v1494 = vrot.slane %v1488, 2
        %v1495 = vsel %vm945, %v1493, %v1494
        %v1496 = vrot.slane %v1489, 2
        %v1497 = vsel %vm945, %v1494, %v1496
        %1498 = vrot.lane.b32.xlu0 %v1493, 127
        %v1499 = vpop.permute.xlu0 %1498
        %1500 = vrot.lane.b32.xlu0 %v1495, 127
        %v1501 = vpop.permute.xlu0 %1500
        %1502 = vrot.lane.b32.xlu0 %v1497, 127
        %v1503 = vpop.permute.xlu0 %1502
        %v1507 = vadd.f32 %v1453, %v1499
        %v1508 = vadd.f32 %v1454, %v1499
        %v1509 = vadd.f32 %v1455, %v1501
        %v1510 = vadd.f32 %v1456, %v1501
        %v1511 = vadd.f32 %v1457, %v1503
        %v1512 = vadd.f32 %v1458, %v1503
        loop: start=0, step=1, limit=32
        $region183: #{main_model_forward.1} parent=39 // loop_pre_header
          _
        $region184: #{main_model_forward.1} parent=39 // loop_header
          %s1514 = sphi 0, %s1518
          %p1515 = scmp.ge.s32.totalorder %s1514, 32
          %v1519 = vphi 0.0, %v1537
          %v1520 = vphi 0.0, %v1538
        $region185: #{main_model_forward.1} parent=39 // loop_header_branch
          %1517 = sbr.rel (%p1515) target = $region189
        $region186: #{main_model_forward.1} parent=39 // loop_body
          %s1521 = sadd.s32 %s1514, 32
          %s1522 = sshra.s32 %s1521, 7
          %s1523 = sand.u32 %s1521, 127
          %s1524 = sadd.s32 %s1522, 8
          %s1525 = smul.u32 %s1524, 128
          %s1526 = sshra.s32 %s1521, 7
          %s1527 = sand.u32 %s1521, 127
          %s1528 = sadd.s32 %s1525, %s1527
          %s1529 = sld [smem:[#allocation10 + %s1528]]
          %s1530 = smul.u32 %s1514, 16
          %s1531 = scalar_lea.vmem [#allocation3], %s1530
          %v1532 = vld [vmem:[%s1531] sm:$0xff]
          %v1533 = vld [vmem:[%s1531 + $0x8] sm:$0xff]
          %v1534 = vstv %s1529
          %v1535 = vmul.f32 %v1534, %v1532
          %v1536 = vmul.f32 %v1534, %v1533
          %v1537 = vadd.f32 %v1519, %v1535
          %v1538 = vadd.f32 %v1520, %v1536
        $region187: #{main_model_forward.1} parent=39 // loop_footer
          %s1518 = sadd.s32 1, %s1514
        $region188: #{main_model_forward.1} parent=39 // loop_footer_branch
          %1513 = sbr.rel target = $region184
        $region189: #{main_model_forward.1} parent=39 // loop_exit
          _
        %1539 = vst.msk [vmem:[#allocation4 + $0x20] sm:$0xff] %vm281, %v1519
        %1540 = vst.msk [vmem:[#allocation4 + $0x38] sm:$0xff] %vm281, %v1520
        %v1541 = vld [vmem:[#allocation4 + $0x20] sm:$0xfe]
        %v1542 = vld [vmem:[#allocation4 + $0x38] sm:$0xff]
        %v1543 = vld [vmem:[#allocation4 + $0x50] sm:$0x1]
        %v1547 = vrot.slane %v1541, 2
        %v1548 = vrot.slane %v1542, 2
        %v1549 = vsel %vm945, %v1547, %v1548
        %v1550 = vrot.slane %v1543, 2
        %v1551 = vsel %vm945, %v1548, %v1550
        %1552 = vrot.lane.b32.xlu0 %v1547, 126
        %v1553 = vpop.permute.xlu0 %1552
        %1554 = vrot.lane.b32.xlu0 %v1549, 126
        %v1555 = vpop.permute.xlu0 %1554
        %1556 = vrot.lane.b32.xlu0 %v1551, 126
        %v1557 = vpop.permute.xlu0 %1556
        %v1561 = vadd.f32 %v1507, %v1553
        %v1562 = vadd.f32 %v1508, %v1553
        %v1563 = vadd.f32 %v1509, %v1555
        %v1564 = vadd.f32 %v1510, %v1555
        %v1565 = vadd.f32 %v1511, %v1557
        %v1566 = vadd.f32 %v1512, %v1557
        %v1567 = vtanh.pop %v1561
        %v1568 = vtanh.pop %v1562
        %v1569 = vtanh.pop %v1563
        %v1570 = vtanh.pop %v1564
        %v1571 = vtanh.pop %v1565
        %v1572 = vtanh.pop %v1566
        %1579 = vrot.lane.b32.xlu0 %v1567, 1
        %v1580 = vpop.permute.xlu0 %1579
        %1581 = vrot.lane.b32.xlu0 %v1568, 1
        %v1582 = vpop.permute.xlu0 %1581
        %1583 = vrot.lane.b32.xlu0 %v1569, 1
        %v1584 = vpop.permute.xlu0 %1583
        %1585 = vrot.lane.b32.xlu0 %v1570, 1
        %v1586 = vpop.permute.xlu0 %1585
        %1587 = vrot.lane.b32.xlu0 %v1571, 1
        %v1588 = vpop.permute.xlu0 %1587
        %1589 = vrot.lane.b32.xlu0 %v1572, 1
        %v1590 = vpop.permute.xlu0 %1589
        %v1591 = vsel %vm1098, %v1580, %v1582
        %v1592 = vsel %vm1098, %v1584, %v1586
        %v1593 = vsel %vm1098, %v1588, %v1590
        %s1597 = scalar_lea.vmem %s273, 16 [#allocation13]
        %1598 = vst.msk [vmem:[%s1597 - $0x7] sm:$0x80] %vm1105, %v1591
        %1599 = vst.msk [vmem:[%s1597 + $0x1] sm:$0xff] %vm281, %v1592
        %1600 = vst.msk [vmem:[%s1597 + $0x9] sm:$0x7f] %vm1108, %v1593
        %s1601 = sand.u32 %s140, 1
        %s1602 = scalar_lea.sflag [#allocation6], %s1601
        %s1603 = sand.u32 %s140, 1
        %s1604 = smul.addr %s1603, 32
        %s1605 = scalar_lea.vmem [#allocation13], %s1604
        // Predicated region
        $region190: #{main_model_forward.1} parent=39 // pred_check
          %p1606 = pneg %p150
        $region191: #{main_model_forward.1} parent=39 // pred_check_branch
          %1608 = sbr.rel (%p1606) target = $region193
        $region192: #{main_model_forward.1} parent=39 // pred_region
          %s1610 = ssub.s32 512, 512
          %1611 = vsyncadd %s1602, %s1610
          %s1612 = smul.addr %s22, 4
          %s1613 = smul.addr %s1612, 128
          %s1614 = scalar_lea.hbm %s5, %s1613
          %s1615 = sshll.u32 %s1605, 4
          %s1616 = int_to_ptr.vmem [resolvable:$true] %s1615
          %1621 = dma.vmem_to_hbm [thread:$0]  %s1616, 512, %s1614, %s1602, 128, 128, 8
        $region193: #{main_model_forward.1} parent=39 // pred_fallthru
          _
      $region40: #{main_model_forward.1} parent=5 // pred_fallthru
        _
      %p1622 = scmp.le.s32.totalorder 2, %s17
      // Predicated region
      $region194: #{main_model_forward.1} parent=5 // pred_check
        %p1623 = pneg %p1622
      $region195: #{main_model_forward.1} parent=5 // pred_check_branch
        %1625 = sbr.rel (%p1623) target = $region197
      $region196: #{main_model_forward.1} parent=5 // pred_region
        %s1626 = ssub.s32 %s17, 2
        // Predicated region
        $region198: #{main_model_forward.1} parent=196 // pred_check
          %p1627 = pneg %p156
        $region199: #{main_model_forward.1} parent=196 // pred_check_branch
          %1629 = sbr.rel (%p1627) target = $region201
        $region200: #{main_model_forward.1} parent=196 // pred_region
          %s1630 = sand.u32 %s141, 1
          %s1631 = scalar_lea.sflag [#allocation6], %s1630
          %s1632 = sand.u32 %s141, 1
          %s1633 = smul.addr %s1632, 32
          %s1634 = scalar_lea.vmem [#allocation13], %s1633
          %1635 = dma.done %s1631, 512
        $region201: #{main_model_forward.1} parent=196 // pred_fallthru
          _
      $region197: #{main_model_forward.1} parent=5 // pred_fallthru
        _
    $region6: #{main_model_forward.1} parent=1 // loop_footer
      %s21 = sadd.s32 1, %s17
    $region7: #{main_model_forward.1} parent=1 // loop_footer_branch
      %16 = sbr.rel target = $region3
    $region8: #{main_model_forward.1} parent=1 // loop_exit
      _
    %1636 = vsyncpa [#allocation6], 1
    %s1637 = scalar_lea.sflag [#allocation6], 1
    %1638 = vsyncpa %s1637, 1
    %1639 = vsyncpa [#allocation7], 1
    %s1640 = scalar_lea.sflag [#allocation7], 1
    %1641 = vsyncpa %s1640, 1
    %1642 = vsyncpa [#allocation9], 1
    %1643 = vsyncpa [#allocation12], 1

</llo_original>
